<compile_context>
chip_gen: v6e
topology: v6e:2x2x1
jax: 0.10.0
libtpu: 0.0.40
codegen_flags: <defaults>
</compile_context>

<pallas_src>
import functools

import jax
import jax.numpy as jnp
from jax import lax
from jax.experimental import pallas as pl
from jax.experimental.pallas import tpu as pltpu

# small, self-consistent synthetic shapes
BATCH = 16         # number of sentences (B)
BT = 8             # sentences per grid block (fills the 8 sublanes)
SEQ = 8            # words per sentence
EMB = 32           # embedding_dim (stand-in for 300 / the [0:50] slice)
HID = 32           # hidden_dim  -> 2H = 64, 8H = 256
OUT = 8            # output_size (number of NER tags)
OUT_PAD = 128      # lane-dense padded output width (sliced back to OUT in wrapper)


def ner_kernel(x_ref,       # [S*BT, 2E]  pre-swizzled rows [x(t) | x(S-1-t)], (t,b) order
               win_ref,     # [2E, 8H]    block-diag input weights, gate-interleaved cols
               wrec_ref,    # [2H, 8H]    block-diag recurrent weights, gate-interleaved
               bias_ref,    # [1, 8H]     folded b_ih+b_hh (both dirs), gate-interleaved
               wout_ref,    # [2H, OP]    output projection (lane padded)
               bout_ref,    # [1, OP]
               out_ref,     # [S*BT, OP]
               *, seq, bt):
    H = wrec_ref.shape[0] // 2
    H2 = 2 * H
    G8 = 8 * H

    # (1) hoisted input projection, both directions, all steps: one MXU call.
    gin = (jnp.dot(x_ref[...], win_ref[...], preferred_element_type=jnp.float32)
           + bias_ref[...])                                   # [S*BT, 8H]

    wrec = wrec_ref[...]                                      # [2H, 8H]

    # (2) hoisted sigmoid->tanh fixup constants (g-gate lanes only). The 2x
    # pre-scale is already folded into w_in/w_rec/bias in the wrapper, so the
    # loop body does a single sigmoid pass + one FMA.
    lane = lax.broadcasted_iota(jnp.int32, (bt, G8), 1)
    is_g = (lane >= 4 * H) & (lane < 6 * H)
    post_mul = jnp.where(is_g, 2.0, 1.0).astype(jnp.float32)
    post_add = jnp.where(is_g, -1.0, 0.0).astype(jnp.float32)

    h = jnp.zeros((bt, H2), jnp.float32)                      # [h_fwd | h_bwd]
    c = jnp.zeros((bt, H2), jnp.float32)
    hs = []
    # (3) static Python unroll: all indices constant-fold, no dynamic VMEM loads
    # or masked sub-lane stores on the serial chain.
    for t in range(seq):
        g = (gin[t * bt:(t + 1) * bt, :]
             + jnp.dot(h, wrec, preferred_element_type=jnp.float32))   # [BT, 8H]
        s = jax.nn.sigmoid(g)                 # single EUP pass over all gate lanes
        act = s * post_mul + post_add         # g lanes -> 2*sigmoid(2x)-1 = tanh(x)
        i_g = act[:, 0:H2]                    # [i_f | i_b]
        f_g = act[:, H2:2 * H2]               # [f_f | f_b]
        g_g = act[:, 2 * H2:3 * H2]           # [g_f | g_b]
        o_g = act[:, 3 * H2:4 * H2]           # [o_f | o_b]
        c = f_g * c + i_g * g_g
        h = o_g * jnp.tanh(c)
        hs.append(h)

    # (4) assemble time-major hidden states: row (t,b) = [h_fwd(t) | h_bwd(t)]
    # (fwd(t) comes from step t, bwd(t) from step S-1-t). Done once, off the
    # recurrence critical path.
    rows = [jnp.concatenate([hs[t][:, 0:H], hs[seq - 1 - t][:, H:H2]], axis=1)
            for t in range(seq)]
    h_all = jnp.concatenate(rows, axis=0)                     # [S*BT, 2H]

    # (5) ReLU; Dropout(0.1) is identity in eval mode.
    # TODO(synk): training-mode dropout mask omitted (eval semantics).
    h_all = jnp.maximum(h_all, 0.0)
    out_ref[...] = (jnp.dot(h_all, wout_ref[...], preferred_element_type=jnp.float32)
                    + bout_ref[...])


@jax.jit
def ner_forward(x, params):
    """x: [B, S, E] float32 word embeddings; params: dict of LSTM/Linear weights."""
    B, S, E = x.shape
    H = HID
    O = params["w_out"].shape[0]
    nb = B // BT
    assert B % BT == 0

    def gate_split(w):  # [*, 4H] -> 4 chunks of [*, H] in PyTorch (i,f,g,o) order
        return [w[:, k * H:(k + 1) * H] for k in range(4)]

    def block_interleave(wf, wb):
        # fwd rows only feed fwd sub-columns, bwd rows only bwd sub-columns,
        # columns interleaved per gate: [i_f|i_b|f_f|f_b|g_f|g_b|o_f|o_b]
        gf, gb = gate_split(wf), gate_split(wb)
        zf = jnp.zeros_like(gf[0])
        zb = jnp.zeros_like(gb[0])
        top = jnp.concatenate([gf[0], zf, gf[1], zf, gf[2], zf, gf[3], zf], axis=1)
        bot = jnp.concatenate([zb, gb[0], zb, gb[1], zb, gb[2], zb, gb[3]], axis=1)
        return jnp.concatenate([top, bot], axis=0)

    w_in = block_interleave(params["w_ih_f"].T, params["w_ih_b"].T)    # [2E, 8H]
    w_rec = block_interleave(params["w_hh_f"].T, params["w_hh_b"].T)   # [2H, 8H]

    b_f = params["b_ih_f"] + params["b_hh_f"]                          # [4H]
    b_b = params["b_ih_b"] + params["b_hh_b"]
    bias = jnp.concatenate(
        [b_f[0:H], b_b[0:H], b_f[H:2 * H], b_b[H:2 * H],
         b_f[2 * H:3 * H], b_b[2 * H:3 * H], b_f[3 * H:4 * H], b_b[3 * H:4 * H]]
    ).reshape(1, 8 * H)

    # fold the tanh(x)=2*sigmoid(2x)-1 pre-scale (2x) into the g-gate columns
    gscale = jnp.ones((8 * H,), jnp.float32).at[4 * H:6 * H].set(2.0)
    w_in = w_in * gscale
    w_rec = w_rec * gscale
    bias = bias * gscale

    # lane-dense padded output projection
    w_out_p = jnp.zeros((2 * H, OUT_PAD), jnp.float32).at[:, :O].set(params["w_out"].T)
    b_out_p = jnp.zeros((1, OUT_PAD), jnp.float32).at[:, :O].set(params["b_out"])

    # pre-swizzled input: row (block, t, b_local) = [x[b, t] | x[b, S-1-t]]
    x_cat = jnp.concatenate([x, x[:, ::-1, :]], axis=-1)               # [B, S, 2E]
    x_swz = (x_cat.reshape(nb, BT, S, 2 * E)
                  .transpose(0, 2, 1, 3)                               # [nb, S, BT, 2E]
                  .reshape(nb * S * BT, 2 * E))

    kernel = functools.partial(ner_kernel, seq=S, bt=BT)
    out_p = pl.pallas_call(
        kernel,
        out_shape=jax.ShapeDtypeStruct((nb * S * BT, OUT_PAD), jnp.float32),
        grid=(nb,),
        in_specs=[
            pl.BlockSpec((S * BT, 2 * E), lambda i: (i, 0)),
            pl.BlockSpec((2 * E, 8 * H), lambda i: (0, 0)),     # weights resident
            pl.BlockSpec((2 * H, 8 * H), lambda i: (0, 0)),
            pl.BlockSpec((1, 8 * H), lambda i: (0, 0)),
            pl.BlockSpec((2 * H, OUT_PAD), lambda i: (0, 0)),
            pl.BlockSpec((1, OUT_PAD), lambda i: (0, 0)),
        ],
        out_specs=pl.BlockSpec((S * BT, OUT_PAD), lambda i: (i, 0)),
        compiler_params=pltpu.CompilerParams(
            dimension_semantics=("parallel",)),                 # 2-TC sharding on v7x
    )(x_swz, w_in, w_rec, bias, w_out_p, b_out_p)

    out = (out_p.reshape(nb, S, BT, OUT_PAD)
                .transpose(0, 2, 1, 3)
                .reshape(B, S, OUT_PAD)[:, :, :O])
    return out


def ner_reference(x, params):
    """Pure-JAX reference (PyTorch bidirectional LSTM -> ReLU -> Linear semantics)."""
    H = HID

    def run(wih, whh, bih, bhh, xs):
        h = jnp.zeros((H,), jnp.float32)
        c = jnp.zeros((H,), jnp.float32)
        outs = []
        for t in range(xs.shape[0]):
            g = xs[t] @ wih.T + bih + h @ whh.T + bhh
            i = jax.nn.sigmoid(g[0:H])
            f = jax.nn.sigmoid(g[H:2 * H])
            gg = jnp.tanh(g[2 * H:3 * H])
            o = jax.nn.sigmoid(g[3 * H:4 * H])
            c = f * c + i * gg
            h = o * jnp.tanh(c)
            outs.append(h)
        return jnp.stack(outs)

    def single(xs):
        hf = run(params["w_ih_f"], params["w_hh_f"], params["b_ih_f"],
                 params["b_hh_f"], xs)
        hb = run(params["w_ih_b"], params["w_hh_b"], params["b_ih_b"],
                 params["b_hh_b"], xs[::-1])[::-1]
        hcat = jnp.maximum(jnp.concatenate([hf, hb], axis=1), 0.0)
        return hcat @ params["w_out"].T + params["b_out"]

    return jnp.stack([single(x[b]) for b in range(x.shape[0])])


def init_params(key, emb, hid, out):
    """Deterministic init mirroring nn.LSTM / nn.Linear parameter shapes."""
    k = 1.0 / jnp.sqrt(hid)
    keys = jax.random.split(key, 10)
    u = lambda kk, shape, bound: jax.random.uniform(kk, shape, jnp.float32, -bound, bound)
    return {
        # forward direction
        "w_ih_f": u(keys[0], (4 * hid, emb), k),
        "w_hh_f": u(keys[1], (4 * hid, hid), k),
        "b_ih_f": u(keys[2], (4 * hid,), k),
        "b_hh_f": u(keys[3], (4 * hid,), k),
        # backward direction
        "w_ih_b": u(keys[4], (4 * hid, emb), k),
        "w_hh_b": u(keys[5], (4 * hid, hid), k),
        "b_ih_b": u(keys[6], (4 * hid,), k),
        "b_hh_b": u(keys[7], (4 * hid,), k),
        # output Linear(2*hid -> out)
        "w_out": u(keys[8], (out, 2 * hid), 1.0 / jnp.sqrt(2 * hid)),
        "b_out": u(keys[9], (out,), 1.0 / jnp.sqrt(2 * hid)),
    }


if __name__ == "__main__":
    key = jax.random.PRNGKey(0)
    k_emb, k_params = jax.random.split(key)

    # TODO(synk): word2vec string->vector lookup is host-side; deterministic
    # random embeddings stand in for it here.
    x = jax.random.normal(k_emb, (BATCH, SEQ, EMB), dtype=jnp.float32)
    params = init_params(k_params, EMB, HID, OUT)

    out = jax.block_until_ready(ner_forward(x, params))

    assert out.shape == (BATCH, SEQ, OUT) and out.dtype == jnp.float32
    assert bool(jnp.all(jnp.isfinite(out)))

    ref = jax.block_until_ready(ner_reference(x, params))
    max_err = float(jnp.max(jnp.abs(out - ref)))
    assert max_err < 1e-3, f"kernel/reference mismatch: max abs err {max_err}"

    print("KERNEL_OK")
</pallas_src>

<mosaic_0001>
module attributes {stable_mosaic.version = 11 : i64} {
  func.func @ner_kernel(%arg0: i32, %arg1: memref<64x64xf32, #tpu.memory_space<vmem>>, %arg2: memref<64x256xf32, #tpu.memory_space<vmem>>, %arg3: memref<64x256xf32, #tpu.memory_space<vmem>>, %arg4: memref<1x256xf32, #tpu.memory_space<vmem>>, %arg5: memref<64x128xf32, #tpu.memory_space<vmem>>, %arg6: memref<1x128xf32, #tpu.memory_space<vmem>>, %arg7: memref<64x128xf32, #tpu.memory_space<vmem>>) attributes {dimension_semantics = [#tpu.dimension_semantics<parallel>], iteration_bounds = array<i64: 2>, scalar_prefetch = 0 : i64, scratch_operands = 0 : i64, tpu.core_type = #tpu.core_type<tc>, window_params = [{transform_indices = @transform_0, window_bounds = array<i64: 64, 64>}, {pipeline_mode = #tpu.pipeline_mode<synchronous>, transform_indices = @transform_1, window_bounds = array<i64: 64, 256>}, {pipeline_mode = #tpu.pipeline_mode<synchronous>, transform_indices = @transform_2, window_bounds = array<i64: 64, 256>}, {pipeline_mode = #tpu.pipeline_mode<synchronous>, transform_indices = @transform_3, window_bounds = array<i64: 1, 256>}, {pipeline_mode = #tpu.pipeline_mode<synchronous>, transform_indices = @transform_4, window_bounds = array<i64: 64, 128>}, {pipeline_mode = #tpu.pipeline_mode<synchronous>, transform_indices = @transform_5, window_bounds = array<i64: 1, 128>}, {transform_indices = @transform_6, window_bounds = array<i64: 64, 128>}]} {
    %c0 = arith.constant 0 : index
    %c0_0 = arith.constant 0 : index
    %0 = vector.load %arg1[%c0, %c0_0] : memref<64x64xf32, #tpu.memory_space<vmem>>, vector<64x64xf32>
    %c0_1 = arith.constant 0 : index
    %c0_2 = arith.constant 0 : index
    %1 = vector.load %arg2[%c0_1, %c0_2] : memref<64x256xf32, #tpu.memory_space<vmem>>, vector<64x256xf32>
    %cst = arith.constant dense<0.000000e+00> : vector<64x256xf32>
    %2 = tpu.matmul %0, %1, %cst {dimension_numbers = #tpu.dot_dimension_numbers<[1], [0], [0], [1], [0, 0, 1, 1], [], []>} : vector<64x64xf32>, vector<64x256xf32>, vector<64x256xf32> -> vector<64x256xf32>
    %c0_3 = arith.constant 0 : index
    %c0_4 = arith.constant 0 : index
    %3 = vector.load %arg4[%c0_3, %c0_4] : memref<1x256xf32, #tpu.memory_space<vmem>>, vector<1x256xf32>
    %4 = vector.broadcast %3 : vector<1x256xf32> to vector<64x256xf32>
    %5 = arith.addf %2, %4 : vector<64x256xf32>
    %c0_5 = arith.constant 0 : index
    %c0_6 = arith.constant 0 : index
    %6 = vector.load %arg3[%c0_5, %c0_6] : memref<64x256xf32, #tpu.memory_space<vmem>>, vector<64x256xf32>
    %7 = tpu.iota {dimensions = array<i32: 1>} : vector<8x256xi32>
    %c128_i32 = arith.constant 128 : i32
    %8 = vector.broadcast %c128_i32 : i32 to vector<8x256xi32>
    %9 = arith.cmpi sge, %7, %8 : vector<8x256xi32>
    %c192_i32 = arith.constant 192 : i32
    %10 = vector.broadcast %c192_i32 : i32 to vector<8x256xi32>
    %11 = arith.cmpi slt, %7, %10 : vector<8x256xi32>
    %12 = arith.andi %9, %11 : vector<8x256xi1>
    %cst_7 = arith.constant 2.000000e+00 : f32
    %cst_8 = arith.constant 1.000000e+00 : f32
    %13 = vector.broadcast %cst_7 : f32 to vector<8x256xf32>
    %14 = vector.broadcast %cst_8 : f32 to vector<8x256xf32>
    %15 = arith.select %12, %13, %14 : vector<8x256xi1>, vector<8x256xf32>
    %cst_9 = arith.constant -1.000000e+00 : f32
    %cst_10 = arith.constant 0.000000e+00 : f32
    %16 = vector.broadcast %cst_9 : f32 to vector<8x256xf32>
    %17 = vector.broadcast %cst_10 : f32 to vector<8x256xf32>
    %18 = arith.select %12, %16, %17 : vector<8x256xi1>, vector<8x256xf32>
    %cst_11 = arith.constant 0.000000e+00 : f32
    %19 = vector.broadcast %cst_11 : f32 to vector<8x64xf32>
    %cst_12 = arith.constant 0.000000e+00 : f32
    %20 = vector.broadcast %cst_12 : f32 to vector<8x64xf32>
    %21 = vector.extract_strided_slice %5 {offsets = [0, 0], sizes = [8, 256], strides = [1, 1]} : vector<64x256xf32> to vector<8x256xf32>
    %cst_13 = arith.constant dense<0.000000e+00> : vector<8x256xf32>
    %22 = tpu.matmul %19, %6, %cst_13 {dimension_numbers = #tpu.dot_dimension_numbers<[1], [0], [0], [1], [0, 0, 1, 1], [], []>} : vector<8x64xf32>, vector<64x256xf32>, vector<8x256xf32> -> vector<8x256xf32>
    %23 = arith.addf %21, %22 : vector<8x256xf32>
    %24 = arith.negf %23 : vector<8x256xf32>
    %25 = math.exp %24 : vector<8x256xf32>
    %cst_14 = arith.constant 1.000000e+00 : f32
    %26 = vector.broadcast %cst_14 : f32 to vector<8x256xf32>
    %27 = arith.addf %26, %25 : vector<8x256xf32>
    %28 = arith.divf %26, %27 : vector<8x256xf32>
    %29 = arith.mulf %28, %15 : vector<8x256xf32>
    %30 = arith.addf %29, %18 : vector<8x256xf32>
    %31 = vector.extract_strided_slice %30 {offsets = [0, 0], sizes = [8, 64], strides = [1, 1]} : vector<8x256xf32> to vector<8x64xf32>
    %32 = vector.extract_strided_slice %30 {offsets = [0, 64], sizes = [8, 64], strides = [1, 1]} : vector<8x256xf32> to vector<8x64xf32>
    %33 = vector.extract_strided_slice %30 {offsets = [0, 128], sizes = [8, 64], strides = [1, 1]} : vector<8x256xf32> to vector<8x64xf32>
    %34 = vector.extract_strided_slice %30 {offsets = [0, 192], sizes = [8, 64], strides = [1, 1]} : vector<8x256xf32> to vector<8x64xf32>
    %35 = arith.mulf %32, %20 : vector<8x64xf32>
    %36 = arith.mulf %31, %33 : vector<8x64xf32>
    %37 = arith.addf %35, %36 : vector<8x64xf32>
    %38 = math.tanh %37 : vector<8x64xf32>
    %39 = arith.mulf %34, %38 : vector<8x64xf32>
    %40 = vector.extract_strided_slice %5 {offsets = [8, 0], sizes = [8, 256], strides = [1, 1]} : vector<64x256xf32> to vector<8x256xf32>
    %cst_15 = arith.constant dense<0.000000e+00> : vector<8x256xf32>
    %41 = tpu.matmul %39, %6, %cst_15 {dimension_numbers = #tpu.dot_dimension_numbers<[1], [0], [0], [1], [0, 0, 1, 1], [], []>} : vector<8x64xf32>, vector<64x256xf32>, vector<8x256xf32> -> vector<8x256xf32>
    %42 = arith.addf %40, %41 : vector<8x256xf32>
    %43 = arith.negf %42 : vector<8x256xf32>
    %44 = math.exp %43 : vector<8x256xf32>
    %cst_16 = arith.constant 1.000000e+00 : f32
    %45 = vector.broadcast %cst_16 : f32 to vector<8x256xf32>
    %46 = arith.addf %45, %44 : vector<8x256xf32>
    %47 = arith.divf %45, %46 : vector<8x256xf32>
    %48 = arith.mulf %47, %15 : vector<8x256xf32>
    %49 = arith.addf %48, %18 : vector<8x256xf32>
    %50 = vector.extract_strided_slice %49 {offsets = [0, 0], sizes = [8, 64], strides = [1, 1]} : vector<8x256xf32> to vector<8x64xf32>
    %51 = vector.extract_strided_slice %49 {offsets = [0, 64], sizes = [8, 64], strides = [1, 1]} : vector<8x256xf32> to vector<8x64xf32>
    %52 = vector.extract_strided_slice %49 {offsets = [0, 128], sizes = [8, 64], strides = [1, 1]} : vector<8x256xf32> to vector<8x64xf32>
    %53 = vector.extract_strided_slice %49 {offsets = [0, 192], sizes = [8, 64], strides = [1, 1]} : vector<8x256xf32> to vector<8x64xf32>
    %54 = arith.mulf %51, %37 : vector<8x64xf32>
    %55 = arith.mulf %50, %52 : vector<8x64xf32>
    %56 = arith.addf %54, %55 : vector<8x64xf32>
    %57 = math.tanh %56 : vector<8x64xf32>
    %58 = arith.mulf %53, %57 : vector<8x64xf32>
    %59 = vector.extract_strided_slice %5 {offsets = [16, 0], sizes = [8, 256], strides = [1, 1]} : vector<64x256xf32> to vector<8x256xf32>
    %cst_17 = arith.constant dense<0.000000e+00> : vector<8x256xf32>
    %60 = tpu.matmul %58, %6, %cst_17 {dimension_numbers = #tpu.dot_dimension_numbers<[1], [0], [0], [1], [0, 0, 1, 1], [], []>} : vector<8x64xf32>, vector<64x256xf32>, vector<8x256xf32> -> vector<8x256xf32>
    %61 = arith.addf %59, %60 : vector<8x256xf32>
    %62 = arith.negf %61 : vector<8x256xf32>
    %63 = math.exp %62 : vector<8x256xf32>
    %cst_18 = arith.constant 1.000000e+00 : f32
    %64 = vector.broadcast %cst_18 : f32 to vector<8x256xf32>
    %65 = arith.addf %64, %63 : vector<8x256xf32>
    %66 = arith.divf %64, %65 : vector<8x256xf32>
    %67 = arith.mulf %66, %15 : vector<8x256xf32>
    %68 = arith.addf %67, %18 : vector<8x256xf32>
    %69 = vector.extract_strided_slice %68 {offsets = [0, 0], sizes = [8, 64], strides = [1, 1]} : vector<8x256xf32> to vector<8x64xf32>
    %70 = vector.extract_strided_slice %68 {offsets = [0, 64], sizes = [8, 64], strides = [1, 1]} : vector<8x256xf32> to vector<8x64xf32>
    %71 = vector.extract_strided_slice %68 {offsets = [0, 128], sizes = [8, 64], strides = [1, 1]} : vector<8x256xf32> to vector<8x64xf32>
    %72 = vector.extract_strided_slice %68 {offsets = [0, 192], sizes = [8, 64], strides = [1, 1]} : vector<8x256xf32> to vector<8x64xf32>
    %73 = arith.mulf %70, %56 : vector<8x64xf32>
    %74 = arith.mulf %69, %71 : vector<8x64xf32>
    %75 = arith.addf %73, %74 : vector<8x64xf32>
    %76 = math.tanh %75 : vector<8x64xf32>
    %77 = arith.mulf %72, %76 : vector<8x64xf32>
    %78 = vector.extract_strided_slice %5 {offsets = [24, 0], sizes = [8, 256], strides = [1, 1]} : vector<64x256xf32> to vector<8x256xf32>
    %cst_19 = arith.constant dense<0.000000e+00> : vector<8x256xf32>
    %79 = tpu.matmul %77, %6, %cst_19 {dimension_numbers = #tpu.dot_dimension_numbers<[1], [0], [0], [1], [0, 0, 1, 1], [], []>} : vector<8x64xf32>, vector<64x256xf32>, vector<8x256xf32> -> vector<8x256xf32>
    %80 = arith.addf %78, %79 : vector<8x256xf32>
    %81 = arith.negf %80 : vector<8x256xf32>
    %82 = math.exp %81 : vector<8x256xf32>
    %cst_20 = arith.constant 1.000000e+00 : f32
    %83 = vector.broadcast %cst_20 : f32 to vector<8x256xf32>
    %84 = arith.addf %83, %82 : vector<8x256xf32>
    %85 = arith.divf %83, %84 : vector<8x256xf32>
    %86 = arith.mulf %85, %15 : vector<8x256xf32>
    %87 = arith.addf %86, %18 : vector<8x256xf32>
    %88 = vector.extract_strided_slice %87 {offsets = [0, 0], sizes = [8, 64], strides = [1, 1]} : vector<8x256xf32> to vector<8x64xf32>
    %89 = vector.extract_strided_slice %87 {offsets = [0, 64], sizes = [8, 64], strides = [1, 1]} : vector<8x256xf32> to vector<8x64xf32>
    %90 = vector.extract_strided_slice %87 {offsets = [0, 128], sizes = [8, 64], strides = [1, 1]} : vector<8x256xf32> to vector<8x64xf32>
    %91 = vector.extract_strided_slice %87 {offsets = [0, 192], sizes = [8, 64], strides = [1, 1]} : vector<8x256xf32> to vector<8x64xf32>
    %92 = arith.mulf %89, %75 : vector<8x64xf32>
    %93 = arith.mulf %88, %90 : vector<8x64xf32>
    %94 = arith.addf %92, %93 : vector<8x64xf32>
    %95 = math.tanh %94 : vector<8x64xf32>
    %96 = arith.mulf %91, %95 : vector<8x64xf32>
    %97 = vector.extract_strided_slice %5 {offsets = [32, 0], sizes = [8, 256], strides = [1, 1]} : vector<64x256xf32> to vector<8x256xf32>
    %cst_21 = arith.constant dense<0.000000e+00> : vector<8x256xf32>
    %98 = tpu.matmul %96, %6, %cst_21 {dimension_numbers = #tpu.dot_dimension_numbers<[1], [0], [0], [1], [0, 0, 1, 1], [], []>} : vector<8x64xf32>, vector<64x256xf32>, vector<8x256xf32> -> vector<8x256xf32>
    %99 = arith.addf %97, %98 : vector<8x256xf32>
    %100 = arith.negf %99 : vector<8x256xf32>
    %101 = math.exp %100 : vector<8x256xf32>
    %cst_22 = arith.constant 1.000000e+00 : f32
    %102 = vector.broadcast %cst_22 : f32 to vector<8x256xf32>
    %103 = arith.addf %102, %101 : vector<8x256xf32>
    %104 = arith.divf %102, %103 : vector<8x256xf32>
    %105 = arith.mulf %104, %15 : vector<8x256xf32>
    %106 = arith.addf %105, %18 : vector<8x256xf32>
    %107 = vector.extract_strided_slice %106 {offsets = [0, 0], sizes = [8, 64], strides = [1, 1]} : vector<8x256xf32> to vector<8x64xf32>
    %108 = vector.extract_strided_slice %106 {offsets = [0, 64], sizes = [8, 64], strides = [1, 1]} : vector<8x256xf32> to vector<8x64xf32>
    %109 = vector.extract_strided_slice %106 {offsets = [0, 128], sizes = [8, 64], strides = [1, 1]} : vector<8x256xf32> to vector<8x64xf32>
    %110 = vector.extract_strided_slice %106 {offsets = [0, 192], sizes = [8, 64], strides = [1, 1]} : vector<8x256xf32> to vector<8x64xf32>
    %111 = arith.mulf %108, %94 : vector<8x64xf32>
    %112 = arith.mulf %107, %109 : vector<8x64xf32>
    %113 = arith.addf %111, %112 : vector<8x64xf32>
    %114 = math.tanh %113 : vector<8x64xf32>
    %115 = arith.mulf %110, %114 : vector<8x64xf32>
    %116 = vector.extract_strided_slice %5 {offsets = [40, 0], sizes = [8, 256], strides = [1, 1]} : vector<64x256xf32> to vector<8x256xf32>
    %cst_23 = arith.constant dense<0.000000e+00> : vector<8x256xf32>
    %117 = tpu.matmul %115, %6, %cst_23 {dimension_numbers = #tpu.dot_dimension_numbers<[1], [0], [0], [1], [0, 0, 1, 1], [], []>} : vector<8x64xf32>, vector<64x256xf32>, vector<8x256xf32> -> vector<8x256xf32>
    %118 = arith.addf %116, %117 : vector<8x256xf32>
    %119 = arith.negf %118 : vector<8x256xf32>
    %120 = math.exp %119 : vector<8x256xf32>
    %cst_24 = arith.constant 1.000000e+00 : f32
    %121 = vector.broadcast %cst_24 : f32 to vector<8x256xf32>
    %122 = arith.addf %121, %120 : vector<8x256xf32>
    %123 = arith.divf %121, %122 : vector<8x256xf32>
    %124 = arith.mulf %123, %15 : vector<8x256xf32>
    %125 = arith.addf %124, %18 : vector<8x256xf32>
    %126 = vector.extract_strided_slice %125 {offsets = [0, 0], sizes = [8, 64], strides = [1, 1]} : vector<8x256xf32> to vector<8x64xf32>
    %127 = vector.extract_strided_slice %125 {offsets = [0, 64], sizes = [8, 64], strides = [1, 1]} : vector<8x256xf32> to vector<8x64xf32>
    %128 = vector.extract_strided_slice %125 {offsets = [0, 128], sizes = [8, 64], strides = [1, 1]} : vector<8x256xf32> to vector<8x64xf32>
    %129 = vector.extract_strided_slice %125 {offsets = [0, 192], sizes = [8, 64], strides = [1, 1]} : vector<8x256xf32> to vector<8x64xf32>
    %130 = arith.mulf %127, %113 : vector<8x64xf32>
    %131 = arith.mulf %126, %128 : vector<8x64xf32>
    %132 = arith.addf %130, %131 : vector<8x64xf32>
    %133 = math.tanh %132 : vector<8x64xf32>
    %134 = arith.mulf %129, %133 : vector<8x64xf32>
    %135 = vector.extract_strided_slice %5 {offsets = [48, 0], sizes = [8, 256], strides = [1, 1]} : vector<64x256xf32> to vector<8x256xf32>
    %cst_25 = arith.constant dense<0.000000e+00> : vector<8x256xf32>
    %136 = tpu.matmul %134, %6, %cst_25 {dimension_numbers = #tpu.dot_dimension_numbers<[1], [0], [0], [1], [0, 0, 1, 1], [], []>} : vector<8x64xf32>, vector<64x256xf32>, vector<8x256xf32> -> vector<8x256xf32>
    %137 = arith.addf %135, %136 : vector<8x256xf32>
    %138 = arith.negf %137 : vector<8x256xf32>
    %139 = math.exp %138 : vector<8x256xf32>
    %cst_26 = arith.constant 1.000000e+00 : f32
    %140 = vector.broadcast %cst_26 : f32 to vector<8x256xf32>
    %141 = arith.addf %140, %139 : vector<8x256xf32>
    %142 = arith.divf %140, %141 : vector<8x256xf32>
    %143 = arith.mulf %142, %15 : vector<8x256xf32>
    %144 = arith.addf %143, %18 : vector<8x256xf32>
    %145 = vector.extract_strided_slice %144 {offsets = [0, 0], sizes = [8, 64], strides = [1, 1]} : vector<8x256xf32> to vector<8x64xf32>
    %146 = vector.extract_strided_slice %144 {offsets = [0, 64], sizes = [8, 64], strides = [1, 1]} : vector<8x256xf32> to vector<8x64xf32>
    %147 = vector.extract_strided_slice %144 {offsets = [0, 128], sizes = [8, 64], strides = [1, 1]} : vector<8x256xf32> to vector<8x64xf32>
    %148 = vector.extract_strided_slice %144 {offsets = [0, 192], sizes = [8, 64], strides = [1, 1]} : vector<8x256xf32> to vector<8x64xf32>
    %149 = arith.mulf %146, %132 : vector<8x64xf32>
    %150 = arith.mulf %145, %147 : vector<8x64xf32>
    %151 = arith.addf %149, %150 : vector<8x64xf32>
    %152 = math.tanh %151 : vector<8x64xf32>
    %153 = arith.mulf %148, %152 : vector<8x64xf32>
    %154 = vector.extract_strided_slice %5 {offsets = [56, 0], sizes = [8, 256], strides = [1, 1]} : vector<64x256xf32> to vector<8x256xf32>
    %cst_27 = arith.constant dense<0.000000e+00> : vector<8x256xf32>
    %155 = tpu.matmul %153, %6, %cst_27 {dimension_numbers = #tpu.dot_dimension_numbers<[1], [0], [0], [1], [0, 0, 1, 1], [], []>} : vector<8x64xf32>, vector<64x256xf32>, vector<8x256xf32> -> vector<8x256xf32>
    %156 = arith.addf %154, %155 : vector<8x256xf32>
    %157 = arith.negf %156 : vector<8x256xf32>
    %158 = math.exp %157 : vector<8x256xf32>
    %cst_28 = arith.constant 1.000000e+00 : f32
    %159 = vector.broadcast %cst_28 : f32 to vector<8x256xf32>
    %160 = arith.addf %159, %158 : vector<8x256xf32>
    %161 = arith.divf %159, %160 : vector<8x256xf32>
    %162 = arith.mulf %161, %15 : vector<8x256xf32>
    %163 = arith.addf %162, %18 : vector<8x256xf32>
    %164 = vector.extract_strided_slice %163 {offsets = [0, 0], sizes = [8, 64], strides = [1, 1]} : vector<8x256xf32> to vector<8x64xf32>
    %165 = vector.extract_strided_slice %163 {offsets = [0, 64], sizes = [8, 64], strides = [1, 1]} : vector<8x256xf32> to vector<8x64xf32>
    %166 = vector.extract_strided_slice %163 {offsets = [0, 128], sizes = [8, 64], strides = [1, 1]} : vector<8x256xf32> to vector<8x64xf32>
    %167 = vector.extract_strided_slice %163 {offsets = [0, 192], sizes = [8, 64], strides = [1, 1]} : vector<8x256xf32> to vector<8x64xf32>
    %168 = arith.mulf %165, %151 : vector<8x64xf32>
    %169 = arith.mulf %164, %166 : vector<8x64xf32>
    %170 = arith.addf %168, %169 : vector<8x64xf32>
    %171 = math.tanh %170 : vector<8x64xf32>
    %172 = arith.mulf %167, %171 : vector<8x64xf32>
    %173 = vector.extract_strided_slice %39 {offsets = [0, 0], sizes = [8, 32], strides = [1, 1]} : vector<8x64xf32> to vector<8x32xf32>
    %174 = vector.extract_strided_slice %172 {offsets = [0, 32], sizes = [8, 32], strides = [1, 1]} : vector<8x64xf32> to vector<8x32xf32>
    %175 = tpu.concatenate %173, %174 in 1 : vector<8x32xf32>, vector<8x32xf32> -> vector<8x64xf32>
    %176 = vector.extract_strided_slice %58 {offsets = [0, 0], sizes = [8, 32], strides = [1, 1]} : vector<8x64xf32> to vector<8x32xf32>
    %177 = vector.extract_strided_slice %153 {offsets = [0, 32], sizes = [8, 32], strides = [1, 1]} : vector<8x64xf32> to vector<8x32xf32>
    %178 = tpu.concatenate %176, %177 in 1 : vector<8x32xf32>, vector<8x32xf32> -> vector<8x64xf32>
    %179 = vector.extract_strided_slice %77 {offsets = [0, 0], sizes = [8, 32], strides = [1, 1]} : vector<8x64xf32> to vector<8x32xf32>
    %180 = vector.extract_strided_slice %134 {offsets = [0, 32], sizes = [8, 32], strides = [1, 1]} : vector<8x64xf32> to vector<8x32xf32>
    %181 = tpu.concatenate %179, %180 in 1 : vector<8x32xf32>, vector<8x32xf32> -> vector<8x64xf32>
    %182 = vector.extract_strided_slice %96 {offsets = [0, 0], sizes = [8, 32], strides = [1, 1]} : vector<8x64xf32> to vector<8x32xf32>
    %183 = vector.extract_strided_slice %115 {offsets = [0, 32], sizes = [8, 32], strides = [1, 1]} : vector<8x64xf32> to vector<8x32xf32>
    %184 = tpu.concatenate %182, %183 in 1 : vector<8x32xf32>, vector<8x32xf32> -> vector<8x64xf32>
    %185 = vector.extract_strided_slice %115 {offsets = [0, 0], sizes = [8, 32], strides = [1, 1]} : vector<8x64xf32> to vector<8x32xf32>
    %186 = vector.extract_strided_slice %96 {offsets = [0, 32], sizes = [8, 32], strides = [1, 1]} : vector<8x64xf32> to vector<8x32xf32>
    %187 = tpu.concatenate %185, %186 in 1 : vector<8x32xf32>, vector<8x32xf32> -> vector<8x64xf32>
    %188 = vector.extract_strided_slice %134 {offsets = [0, 0], sizes = [8, 32], strides = [1, 1]} : vector<8x64xf32> to vector<8x32xf32>
    %189 = vector.extract_strided_slice %77 {offsets = [0, 32], sizes = [8, 32], strides = [1, 1]} : vector<8x64xf32> to vector<8x32xf32>
    %190 = tpu.concatenate %188, %189 in 1 : vector<8x32xf32>, vector<8x32xf32> -> vector<8x64xf32>
    %191 = vector.extract_strided_slice %153 {offsets = [0, 0], sizes = [8, 32], strides = [1, 1]} : vector<8x64xf32> to vector<8x32xf32>
    %192 = vector.extract_strided_slice %58 {offsets = [0, 32], sizes = [8, 32], strides = [1, 1]} : vector<8x64xf32> to vector<8x32xf32>
    %193 = tpu.concatenate %191, %192 in 1 : vector<8x32xf32>, vector<8x32xf32> -> vector<8x64xf32>
    %194 = vector.extract_strided_slice %172 {offsets = [0, 0], sizes = [8, 32], strides = [1, 1]} : vector<8x64xf32> to vector<8x32xf32>
    %195 = vector.extract_strided_slice %39 {offsets = [0, 32], sizes = [8, 32], strides = [1, 1]} : vector<8x64xf32> to vector<8x32xf32>
    %196 = tpu.concatenate %194, %195 in 1 : vector<8x32xf32>, vector<8x32xf32> -> vector<8x64xf32>
    %197 = tpu.concatenate %175, %178, %181, %184, %187, %190, %193, %196 in 0 : vector<8x64xf32>, vector<8x64xf32>, vector<8x64xf32>, vector<8x64xf32>, vector<8x64xf32>, vector<8x64xf32>, vector<8x64xf32>, vector<8x64xf32> -> vector<64x64xf32>
    %cst_29 = arith.constant 0.000000e+00 : f32
    %198 = vector.broadcast %cst_29 : f32 to vector<64x64xf32>
    %199 = arith.maximumf %197, %198 : vector<64x64xf32>
    %c0_30 = arith.constant 0 : index
    %c0_31 = arith.constant 0 : index
    %200 = vector.load %arg5[%c0_30, %c0_31] : memref<64x128xf32, #tpu.memory_space<vmem>>, vector<64x128xf32>
    %cst_32 = arith.constant dense<0.000000e+00> : vector<64x128xf32>
    %201 = tpu.matmul %199, %200, %cst_32 {dimension_numbers = #tpu.dot_dimension_numbers<[1], [0], [0], [1], [0, 0, 1, 1], [], []>} : vector<64x64xf32>, vector<64x128xf32>, vector<64x128xf32> -> vector<64x128xf32>
    %c0_33 = arith.constant 0 : index
    %c0_34 = arith.constant 0 : index
    %202 = vector.load %arg6[%c0_33, %c0_34] : memref<1x128xf32, #tpu.memory_space<vmem>>, vector<1x128xf32>
    %203 = vector.broadcast %202 : vector<1x128xf32> to vector<64x128xf32>
    %204 = arith.addf %201, %203 : vector<64x128xf32>
    %c0_35 = arith.constant 0 : index
    %c0_36 = arith.constant 0 : index
    %205 = vector.load %arg7[%c0_35, %c0_36] : memref<64x128xf32, #tpu.memory_space<vmem>>, vector<64x128xf32>
    tpu.vector_store %arg7[%c0_35, %c0_36], %204 {strides = array<i32>} : memref<64x128xf32, #tpu.memory_space<vmem>>, vector<64x128xf32>,
    return
  }
  func.func @transform_0(%arg0: i32) -> (i32, i32) {
    %c0_i32 = arith.constant 0 : i32
    %c0_i32_0 = arith.constant 0 : i32
    return %arg0, %c0_i32 : i32, i32
  }
  func.func @transform_1(%arg0: i32) -> (i32, i32) {
    %c0_i32 = arith.constant 0 : i32
    %c0_i32_0 = arith.constant 0 : i32
    %c0_i32_1 = arith.constant 0 : i32
    return %c0_i32, %c0_i32_0 : i32, i32
  }
  func.func @transform_2(%arg0: i32) -> (i32, i32) {
    %c0_i32 = arith.constant 0 : i32
    %c0_i32_0 = arith.constant 0 : i32
    %c0_i32_1 = arith.constant 0 : i32
    return %c0_i32, %c0_i32_0 : i32, i32
  }
  func.func @transform_3(%arg0: i32) -> (i32, i32) {
    %c0_i32 = arith.constant 0 : i32
    %c0_i32_0 = arith.constant 0 : i32
    %c0_i32_1 = arith.constant 0 : i32
    return %c0_i32, %c0_i32_0 : i32, i32
  }
  func.func @transform_4(%arg0: i32) -> (i32, i32) {
    %c0_i32 = arith.constant 0 : i32
    %c0_i32_0 = arith.constant 0 : i32
    %c0_i32_1 = arith.constant 0 : i32
    return %c0_i32, %c0_i32_0 : i32, i32
  }
  func.func @transform_5(%arg0: i32) -> (i32, i32) {
    %c0_i32 = arith.constant 0 : i32
    %c0_i32_0 = arith.constant 0 : i32
    %c0_i32_1 = arith.constant 0 : i32
    return %c0_i32, %c0_i32_0 : i32, i32
  }
  func.func @transform_6(%arg0: i32) -> (i32, i32) {
    %c0_i32 = arith.constant 0 : i32
    %c0_i32_0 = arith.constant 0 : i32
    return %arg0, %c0_i32 : i32, i32
  }
}

</mosaic_0001>

<llo_original>
// kernel: mul.5
$region0: #{mul.5}
  #allocation0 [shape = 's32[1]{0}', space=sflag, size = 0x4, scoped, tag = 'scoped memory for mul.5']
  %s0 = inlined_call_operand.vmem [shape: f32[1,256], index: 0, kind: input, shape index: {}]
  %s1 = inlined_call_operand.vmem [shape: f32[1,256], index: 1, kind: input, shape index: {}]
  %s2 = inlined_call_operand.vmem [shape: f32[1,256], index: 2, kind: output, shape index: {}]
  %v3 = vld [vmem:[%s0] sm:$0x1]
  %v4 = vld [vmem:[%s1] sm:$0x1]
  %5 = xla_tuple %v3, %v4
  %6 = xla_tuple %5
  %v7 = vmul.f32 %v3, %v4
  %8 = xla_tuple %v7
  %9 = vst [vmem:[%s2] sm:$0x1] %v7
  %s10 = scalar_lea.vmem %s0, 1
  %v11 = vld [vmem:[%s10] sm:$0x1]
  %s12 = scalar_lea.vmem %s1, 1
  %v13 = vld [vmem:[%s12] sm:$0x1]
  %14 = xla_tuple %v11, %v13
  %15 = xla_tuple %14
  %v16 = vmul.f32 %v11, %v13
  %17 = xla_tuple %v16
  %s18 = scalar_lea.vmem %s2, 1
  %19 = vst [vmem:[%s18] sm:$0x1] %v16

// kernel: ner_forward.1
$region0: #{ner_forward.1}
  #allocation0 [shape = 'u32[]', space=smem, size = 0x4, offset = 0x4, fixed_abs, tag = 'smem constant byte address 0x4 - core index']
  #allocation1 [shape = 'u32[144,128]{1,0:T(1,128)}', space=vmem, size = 0x12000, scoped, tag = 'internal scratch']
  %s0 = inlined_call_operand.vmem [shape: f32[128,64], index: 0, kind: input, shape index: {}]
  %s1 = inlined_call_operand.vmem [shape: f32[64,256], index: 1, kind: input, shape index: {}]
  %s2 = inlined_call_operand.vmem [shape: f32[64,256], index: 2, kind: input, shape index: {}]
  %s3 = inlined_call_operand.vmem [shape: f32[1,256], index: 3, kind: input, shape index: {}]
  %s4 = inlined_call_operand.vmem [shape: f32[64,128], index: 4, kind: input, shape index: {}]
  %s5 = inlined_call_operand.vmem [shape: f32[1,128], index: 5, kind: input, shape index: {}]
  %s6 = inlined_call_operand.vmem [shape: f32[128,128], index: 6, kind: output, shape index: {}]
  %s7 = sld [smem:[#allocation0]]
  $region57: #{ner_forward.1} parent=0
    _
  %s9 = ssub.s32 1, %s7
  %s10 = scalar_select 0, %s9, %s7
  loop: start=0, step=1, limit=4
  $region2: #{ner_forward.1} parent=0 // loop_pre_header
    _
  $region3: #{ner_forward.1} parent=0 // loop_header
    %s12 = sphi 0, %s16
    %p13 = scmp.ge.s32.totalorder %s12, 4
    %s22 = sphi 0, %s24
    %s25 = sphi 0, %s22
    %s26 = sphi 0, %s25
    %s42 = sphi 0, %s26
    %s46 = sphi 0, %s46
    %s48 = sphi 0, %s46
    %s49 = sphi 0, %s48
    %s63 = sphi 0, %s49
    %s67 = sphi 0, %s67
    %s69 = sphi 0, %s67
    %s70 = sphi 0, %s69
    %s84 = sphi 0, %s70
    %s88 = sphi 0, %s88
    %s90 = sphi 0, %s88
    %s91 = sphi 0, %s90
    %s105 = sphi 0, %s91
    %s109 = sphi 0, %s109
    %s111 = sphi 0, %s109
    %s112 = sphi 0, %s111
    %s126 = sphi 0, %s112
    %s130 = sphi 0, %s130
    %s132 = sphi 0, %s130
    %s133 = sphi 0, %s132
    %s147 = sphi 0, %s133
    %s153 = sphi 0, %s155
    %s156 = sphi 0, %s153
    %s157 = sphi 0, %s156
    %s173 = sphi 0, %s157
  $region4: #{ner_forward.1} parent=0 // loop_header_branch
    %15 = sbr.rel (%p13) target = $region8
  $region5: #{ner_forward.1} parent=0 // loop_body
    %s17 = ssub.s32 %s12, 1
    %s18 = ssub.s32 %s12, 2
    %s19 = sadd.s32 %s12, 1
    %s20 = ssub.s32 %s12, %s19
    %p21 = scmp.eq.s32.totalorder %s20, 0
    %s23 = sadd.s32 %s22, 1
    %s24 = scalar_select %p21, %s22, %s23
    %p27 = pneg %p21
    %p28 = scmp.eq.s32.totalorder %s12, 1
    %p29 = por %p27, %p28
    %p30 = scmp.ne.s32.totalorder %s22, %s25
    %p31 = scmp.eq.s32.totalorder %s12, 0
    %p32 = por %p30, %p31
    %p33 = scmp.ne.s32.totalorder %s22, %s25
    %p34 = scmp.eq.s32.totalorder %s17, 1
    %p35 = por %p33, %p34
    %p36 = scmp.ne.s32.totalorder %s25, %s26
    %p37 = scmp.eq.s32.totalorder %s17, 0
    %p38 = por %p36, %p37
    %p39 = scmp.ne.s32.totalorder %s25, %s26
    %p40 = scmp.eq.s32.totalorder %s18, 1
    %p41 = por %p39, %p40
    %p43 = scmp.ne.s32.totalorder %s26, %s42
    %p44 = scmp.eq.s32.totalorder %s18, 0
    %p45 = por %p43, %p44
    %s47 = sadd.s32 %s46, 1
    %p50 = scmp.eq.s32.totalorder %s12, 1
    %p51 = scmp.ne.s32.totalorder %s46, %s48
    %p52 = scmp.eq.s32.totalorder %s12, 0
    %p53 = por %p51, %p52
    %p54 = scmp.ne.s32.totalorder %s46, %s48
    %p55 = scmp.eq.s32.totalorder %s17, 1
    %p56 = por %p54, %p55
    %p57 = scmp.ne.s32.totalorder %s48, %s49
    %p58 = scmp.eq.s32.totalorder %s17, 0
    %p59 = por %p57, %p58
    %p60 = scmp.ne.s32.totalorder %s48, %s49
    %p61 = scmp.eq.s32.totalorder %s18, 1
    %p62 = por %p60, %p61
    %p64 = scmp.ne.s32.totalorder %s49, %s63
    %p65 = scmp.eq.s32.totalorder %s18, 0
    %p66 = por %p64, %p65
    %s68 = sadd.s32 %s67, 1
    %p71 = scmp.eq.s32.totalorder %s12, 1
    %p72 = scmp.ne.s32.totalorder %s67, %s69
    %p73 = scmp.eq.s32.totalorder %s12, 0
    %p74 = por %p72, %p73
    %p75 = scmp.ne.s32.totalorder %s67, %s69
    %p76 = scmp.eq.s32.totalorder %s17, 1
    %p77 = por %p75, %p76
    %p78 = scmp.ne.s32.totalorder %s69, %s70
    %p79 = scmp.eq.s32.totalorder %s17, 0
    %p80 = por %p78, %p79
    %p81 = scmp.ne.s32.totalorder %s69, %s70
    %p82 = scmp.eq.s32.totalorder %s18, 1
    %p83 = por %p81, %p82
    %p85 = scmp.ne.s32.totalorder %s70, %s84
    %p86 = scmp.eq.s32.totalorder %s18, 0
    %p87 = por %p85, %p86
    %s89 = sadd.s32 %s88, 1
    %p92 = scmp.eq.s32.totalorder %s12, 1
    %p93 = scmp.ne.s32.totalorder %s88, %s90
    %p94 = scmp.eq.s32.totalorder %s12, 0
    %p95 = por %p93, %p94
    %p96 = scmp.ne.s32.totalorder %s88, %s90
    %p97 = scmp.eq.s32.totalorder %s17, 1
    %p98 = por %p96, %p97
    %p99 = scmp.ne.s32.totalorder %s90, %s91
    %p100 = scmp.eq.s32.totalorder %s17, 0
    %p101 = por %p99, %p100
    %p102 = scmp.ne.s32.totalorder %s90, %s91
    %p103 = scmp.eq.s32.totalorder %s18, 1
    %p104 = por %p102, %p103
    %p106 = scmp.ne.s32.totalorder %s91, %s105
    %p107 = scmp.eq.s32.totalorder %s18, 0
    %p108 = por %p106, %p107
    %s110 = sadd.s32 %s109, 1
    %p113 = scmp.eq.s32.totalorder %s12, 1
    %p114 = scmp.ne.s32.totalorder %s109, %s111
    %p115 = scmp.eq.s32.totalorder %s12, 0
    %p116 = por %p114, %p115
    %p117 = scmp.ne.s32.totalorder %s109, %s111
    %p118 = scmp.eq.s32.totalorder %s17, 1
    %p119 = por %p117, %p118
    %p120 = scmp.ne.s32.totalorder %s111, %s112
    %p121 = scmp.eq.s32.totalorder %s17, 0
    %p122 = por %p120, %p121
    %p123 = scmp.ne.s32.totalorder %s111, %s112
    %p124 = scmp.eq.s32.totalorder %s18, 1
    %p125 = por %p123, %p124
    %p127 = scmp.ne.s32.totalorder %s112, %s126
    %p128 = scmp.eq.s32.totalorder %s18, 0
    %p129 = por %p127, %p128
    %s131 = sadd.s32 %s130, 1
    %p134 = scmp.eq.s32.totalorder %s12, 1
    %p135 = scmp.ne.s32.totalorder %s130, %s132
    %p136 = scmp.eq.s32.totalorder %s12, 0
    %p137 = por %p135, %p136
    %p138 = scmp.ne.s32.totalorder %s130, %s132
    %p139 = scmp.eq.s32.totalorder %s17, 1
    %p140 = por %p138, %p139
    %p141 = scmp.ne.s32.totalorder %s132, %s133
    %p142 = scmp.eq.s32.totalorder %s17, 0
    %p143 = por %p141, %p142
    %p144 = scmp.ne.s32.totalorder %s132, %s133
    %p145 = scmp.eq.s32.totalorder %s18, 1
    %p146 = por %p144, %p145
    %p148 = scmp.ne.s32.totalorder %s133, %s147
    %p149 = scmp.eq.s32.totalorder %s18, 0
    %p150 = por %p148, %p149
    %s151 = ssub.s32 %s12, %s19
    %p152 = scmp.eq.s32.totalorder %s151, 0
    %s154 = sadd.s32 %s153, 1
    %s155 = scalar_select %p152, %s153, %s154
    %p158 = pneg %p152
    %p159 = scmp.eq.s32.totalorder %s12, 1
    %p160 = por %p158, %p159
    %p161 = scmp.ne.s32.totalorder %s153, %s156
    %p162 = scmp.eq.s32.totalorder %s12, 0
    %p163 = por %p161, %p162
    %p164 = scmp.ne.s32.totalorder %s153, %s156
    %p165 = scmp.eq.s32.totalorder %s17, 1
    %p166 = por %p164, %p165
    %p167 = scmp.ne.s32.totalorder %s156, %s157
    %p168 = scmp.eq.s32.totalorder %s17, 0
    %p169 = por %p167, %p168
    %p170 = scmp.ne.s32.totalorder %s156, %s157
    %p171 = scmp.eq.s32.totalorder %s18, 1
    %p172 = por %p170, %p171
    %p174 = scmp.ne.s32.totalorder %s157, %s173
    %p175 = scmp.eq.s32.totalorder %s18, 0
    %p176 = por %p174, %p175
    %p177 = scmp.le.s32.totalorder 1, %s12
    %p178 = scmp.lt.s32.totalorder %s12, 3
    %p179 = pnand %p177, %p178
    %p180 = pneg %p179
    // Predicated region
    $region9: #{ner_forward.1} parent=5 // pred_check
      _
    $region10: #{ner_forward.1} parent=5 // pred_check_branch
      %182 = sbr.rel (%p179) target = $region12
    $region11: #{ner_forward.1} parent=5 // pred_region
      %s183 = ssub.s32 %s12, 1
      // Predicated region
      $region13: #{ner_forward.1} parent=11 // pred_check
        %p184 = pneg %p59
      $region14: #{ner_forward.1} parent=11 // pred_check_branch
        %186 = sbr.rel (%p184) target = $region16
      $region15: #{ner_forward.1} parent=11 // pred_region
        _
      $region16: #{ner_forward.1} parent=11 // pred_fallthru
        _
      // Predicated region
      $region17: #{ner_forward.1} parent=11 // pred_check
        %p187 = pneg %p80
      $region18: #{ner_forward.1} parent=11 // pred_check_branch
        %189 = sbr.rel (%p187) target = $region20
      $region19: #{ner_forward.1} parent=11 // pred_region
        _
      $region20: #{ner_forward.1} parent=11 // pred_fallthru
        _
      // Predicated region
      $region21: #{ner_forward.1} parent=11 // pred_check
        %p190 = pneg %p101
      $region22: #{ner_forward.1} parent=11 // pred_check_branch
        %192 = sbr.rel (%p190) target = $region24
      $region23: #{ner_forward.1} parent=11 // pred_region
        _
      $region24: #{ner_forward.1} parent=11 // pred_fallthru
        _
      // Predicated region
      $region25: #{ner_forward.1} parent=11 // pred_check
        %p193 = pneg %p122
      $region26: #{ner_forward.1} parent=11 // pred_check_branch
        %195 = sbr.rel (%p193) target = $region28
      $region27: #{ner_forward.1} parent=11 // pred_region
        _
      $region28: #{ner_forward.1} parent=11 // pred_fallthru
        _
      // Predicated region
      $region29: #{ner_forward.1} parent=11 // pred_check
        %p196 = pneg %p143
      $region30: #{ner_forward.1} parent=11 // pred_check_branch
        %198 = sbr.rel (%p196) target = $region32
      $region31: #{ner_forward.1} parent=11 // pred_region
        _
      $region32: #{ner_forward.1} parent=11 // pred_fallthru
        _
    $region12: #{ner_forward.1} parent=5 // pred_fallthru
      _
    %p199 = scmp.lt.s32.totalorder %s12, 2
    // Predicated region
    $region33: #{ner_forward.1} parent=5 // pred_check
      %p200 = pneg %p199
    $region34: #{ner_forward.1} parent=5 // pred_check_branch
      %202 = sbr.rel (%p200) target = $region36
    $region35: #{ner_forward.1} parent=5 // pred_region
      // Predicated region
      $region37: #{ner_forward.1} parent=35 // pred_check
        %p203 = pneg %p32
      $region38: #{ner_forward.1} parent=35 // pred_check_branch
        %205 = sbr.rel (%p203) target = $region40
      $region39: #{ner_forward.1} parent=35 // pred_region
        %s206 = smul.u32 8, %s12
        %p207 = scmp.lt.s32.totalorder %s206, 15
        %s208 = scalar_select %p207, %s206, 15
        %s209 = smul.addr %s208, 8
        %s210 = scalar_lea.vmem %s0, %s209
        %s211 = smul.u32 8, %s12
      $region40: #{ner_forward.1} parent=35 // pred_fallthru
        _
    $region36: #{ner_forward.1} parent=5 // pred_fallthru
      _
    %p212 = scmp.le.s32.totalorder 1, %s12
    %p213 = scmp.lt.s32.totalorder %s12, 3
    %p214 = pnand %p212, %p213
    %p215 = pneg %p214
    // Predicated region
    $region41: #{ner_forward.1} parent=5 // pred_check
      _
    $region42: #{ner_forward.1} parent=5 // pred_check_branch
      %217 = sbr.rel (%p214) target = $region44
    $region43: #{ner_forward.1} parent=5 // pred_region
      %s218 = ssub.s32 %s12, 1
      %s219 = smul.u32 8, %s17
      %p220 = scmp.lt.s32.totalorder %s219, 15
      %s221 = scalar_select %p220, %s219, 15
      %s222 = smul.addr %s221, 8
      %s223 = scalar_lea.vmem %s0, %s222
      %p224 = pneg %p38
      %p225 = pneg %p35
      %p226 = pneg %p59
      %p227 = pneg %p56
      %p228 = pneg %p80
      %p229 = pneg %p77
      %p230 = pneg %p101
      %p231 = pneg %p98
      %p232 = pneg %p122
      %p233 = pneg %p119
      %p234 = pneg %p143
      %p235 = pneg %p140
      %p236 = pneg %p169
      %p237 = pneg %p166
      %s238 = smul.u32 8, %s17
      %p239 = scmp.lt.s32.totalorder %s238, 15
      %s240 = scalar_select %p239, %s238, 15
      %s241 = smul.addr %s240, 8
      %s242 = scalar_lea.vmem %s6, %s241
      %s243 = smul.u32 8, %s17
      %p244 = scmp.lt.s32.totalorder %s243, 15
      %s245 = scalar_select %p244, %s243, 15
      %s246 = smul.addr %s245, 8
      %s247 = scalar_lea.vmem %s0, %s246
      %s248 = smul.u32 8, %s17
      %s249 = smul.u32 8, %s17
      %p250 = scmp.lt.s32.totalorder %s249, 15
      %s251 = scalar_select %p250, %s249, 15
      %s252 = smul.addr %s251, 8
      %s253 = scalar_lea.vmem %s6, %s252
      %s254 = smul.u32 8, %s17
      %v255 = vld [vmem:[%s247] sm:$0xff]
      %v256 = vld [vmem:[%s247 + $0x8] sm:$0xff]
      %v257 = vld [vmem:[%s247 + $0x10] sm:$0xff]
      %v258 = vld [vmem:[%s247 + $0x18] sm:$0xff]
      %v259 = vld [vmem:[%s247 + $0x20] sm:$0xff]
      %v260 = vld [vmem:[%s247 + $0x28] sm:$0xff]
      %v261 = vld [vmem:[%s247 + $0x30] sm:$0xff]
      %v262 = vld [vmem:[%s247 + $0x38] sm:$0xff]
      %v263 = vld [vmem:[%s1] sm:$0xff]
      %v264 = vld [vmem:[%s1 + $0x8] sm:$0xff]
      %v265 = vld [vmem:[%s1 + $0x10] sm:$0xff]
      %v266 = vld [vmem:[%s1 + $0x18] sm:$0xff]
      %v267 = vld [vmem:[%s1 + $0x20] sm:$0xff]
      %v268 = vld [vmem:[%s1 + $0x28] sm:$0xff]
      %v269 = vld [vmem:[%s1 + $0x30] sm:$0xff]
      %v270 = vld [vmem:[%s1 + $0x38] sm:$0xff]
      %v271 = vld [vmem:[%s1 + $0x40] sm:$0xff]
      %v272 = vld [vmem:[%s1 + $0x48] sm:$0xff]
      %v273 = vld [vmem:[%s1 + $0x50] sm:$0xff]
      %v274 = vld [vmem:[%s1 + $0x58] sm:$0xff]
      %v275 = vld [vmem:[%s1 + $0x60] sm:$0xff]
      %v276 = vld [vmem:[%s1 + $0x68] sm:$0xff]
      %v277 = vld [vmem:[%s1 + $0x70] sm:$0xff]
      %v278 = vld [vmem:[%s1 + $0x78] sm:$0xff]
      %v279 = vld [vmem:[%s3] sm:$0x3]
      %v281 = vlaneseq
      %v282 = vshrl.u32 %v281, 7
      %v283 = vsub.s32 0, %v282
      %v284 = vrot.slane %v279, %v283
      %v285 = vlaneseq
      %v286 = vshrl.u32 %v285, 7
      %v287 = vsub.s32 1, %v286
      %v288 = vrot.slane %v279, %v287
      %vm291 = vcmask 523264
      %v293 = vsel %vm291, %v255, 0
      %v296 = vsel %vm291, %v256, 0
      %v299 = vsel %vm291, %v257, 0
      %v302 = vsel %vm291, %v258, 0
      %v305 = vsel %vm291, %v259, 0
      %v308 = vsel %vm291, %v260, 0
      %v311 = vsel %vm291, %v261, 0
      %v314 = vsel %vm291, %v262, 0
      %316 = vmatprep.subr.mxu0 0.0
      %317 = vmatpush1.msra.mxu0 0.0
      %318 = vmatprep.subr.mxu0 0.0
      %319 = vmatpush1.msra.mxu0 0.0
      %320 = vmatprep.subr.mxu0 0.0
      %321 = vmatpush1.msra.mxu0 0.0
      %322 = vmatprep.subr.mxu0 0.0
      %323 = vmatpush1.msra.mxu0 0.0
      %324 = vmatprep.subr.mxu0 0.0
      %325 = vmatpush1.msra.mxu0 0.0
      %326 = vmatprep.subr.mxu0 0.0
      %327 = vmatpush1.msra.mxu0 0.0
      %328 = vmatprep.subr.mxu0 0.0
      %329 = vmatpush1.msra.mxu0 0.0
      %330 = vmatprep.subr.mxu0 0.0
      %331 = vmatpush1.msra.mxu0 0.0
      %332 = vmatprep.subr.mxu0 %v278
      %333 = vmatpush1.msra.mxu0 %v277
      %334 = vmatprep.subr.mxu0 %v276
      %335 = vmatpush1.msra.mxu0 %v275
      %336 = vmatprep.subr.mxu0 %v274
      %337 = vmatpush1.msra.mxu0 %v273
      %338 = vmatprep.subr.mxu0 %v272
      %339 = vmatpush1.msra.mxu0 %v271
      %340 = vmatprep.subr.mxu0 %v270
      %341 = vmatpush1.msra.mxu0 %v269
      %342 = vmatprep.subr.mxu0 %v268
      %343 = vmatpush1.msra.mxu0 %v267
      %344 = vmatprep.subr.mxu0 %v266
      %345 = vmatpush1.msra.mxu0 %v265
      %346 = vmatprep.subr.mxu0 %v264
      %347 = vmatpush1.msra.mxu0 %v263
      %348 = vmatprep.subr.mxu0 0.0
      %349 = vmatpush2.msra.mxu0 0.0
      %350 = vmatprep.subr.mxu0 0.0
      %351 = vmatpush2.msra.mxu0 0.0
      %352 = vmatprep.subr.mxu0 0.0
      %353 = vmatpush2.msra.mxu0 0.0
      %354 = vmatprep.subr.mxu0 0.0
      %355 = vmatpush2.msra.mxu0 0.0
      %356 = vmatprep.subr.mxu0 0.0
      %357 = vmatpush2.msra.mxu0 0.0
      %358 = vmatprep.subr.mxu0 0.0
      %359 = vmatpush2.msra.mxu0 0.0
      %360 = vmatprep.subr.mxu0 0.0
      %361 = vmatpush2.msra.mxu0 0.0
      %362 = vmatprep.subr.mxu0 0.0
      %363 = vmatpush2.msra.mxu0 0.0
      %364 = vmatprep.subr.mxu0 0.0
      %365 = vmatpush2.msra.mxu0 0.0
      %366 = vmatprep.subr.mxu0 0.0
      %367 = vmatpush2.msra.mxu0 0.0
      %368 = vmatprep.subr.mxu0 0.0
      %369 = vmatpush2.msra.mxu0 0.0
      %370 = vmatprep.subr.mxu0 0.0
      %371 = vmatpush2.msra.mxu0 0.0
      %372 = vmatprep.subr.mxu0 0.0
      %373 = vmatpush2.msra.mxu0 0.0
      %374 = vmatprep.subr.mxu0 0.0
      %375 = vmatpush2.msra.mxu0 0.0
      %376 = vmatprep.subr.mxu0 0.0
      %377 = vmatpush2.msra.mxu0 0.0
      %378 = vmatprep.subr.mxu0 0.0
      %379 = vmatpush2.msra.mxu0 0.0
      %380 = vmatprep.mubr.f32.mxu0 0.0
      %381 = vmatmul.mubr.f32.gmra.mxu0 %v293
      %v382 = vpop.f32.mrf.mxu0
      %v383 = vadd.f32 %v284, %v382
      %v384 = vpop.f32.mrf.mxu0
      %v385 = vadd.f32 %v288, %v384
      %386 = vmatprep.mubr.f32.mxu0 0.0
      %387 = vmatmul.mubr.f32.gmra.mxu0 %v296
      %v388 = vpop.f32.mrf.mxu0
      %v389 = vadd.f32 %v284, %v388
      %v390 = vpop.f32.mrf.mxu0
      %v391 = vadd.f32 %v288, %v390
      %392 = vmatprep.mubr.f32.mxu0 0.0
      %393 = vmatmul.mubr.f32.gmra.mxu0 %v299
      %v394 = vpop.f32.mrf.mxu0
      %v395 = vadd.f32 %v284, %v394
      %v396 = vpop.f32.mrf.mxu0
      %v397 = vadd.f32 %v288, %v396
      %398 = vmatprep.mubr.f32.mxu0 0.0
      %399 = vmatmul.mubr.f32.gmra.mxu0 %v302
      %v400 = vpop.f32.mrf.mxu0
      %v401 = vadd.f32 %v284, %v400
      %v402 = vpop.f32.mrf.mxu0
      %v403 = vadd.f32 %v288, %v402
      %404 = vmatprep.mubr.f32.mxu0 0.0
      %405 = vmatmul.mubr.f32.gmra.mxu0 %v305
      %v406 = vpop.f32.mrf.mxu0
      %v407 = vadd.f32 %v284, %v406
      %v408 = vpop.f32.mrf.mxu0
      %v409 = vadd.f32 %v288, %v408
      %410 = vmatprep.mubr.f32.mxu0 0.0
      %411 = vmatmul.mubr.f32.gmra.mxu0 %v308
      %v412 = vpop.f32.mrf.mxu0
      %v413 = vadd.f32 %v284, %v412
      %v414 = vpop.f32.mrf.mxu0
      %v415 = vadd.f32 %v288, %v414
      %416 = vmatprep.mubr.f32.mxu0 0.0
      %417 = vmatmul.mubr.f32.gmra.mxu0 %v311
      %v418 = vpop.f32.mrf.mxu0
      %v419 = vadd.f32 %v284, %v418
      %v420 = vpop.f32.mrf.mxu0
      %v421 = vadd.f32 %v288, %v420
      %422 = vmatprep.mubr.f32.mxu0 0.0
      %423 = vmatmul.mubr.f32.gmra.mxu0 %v314
      %v424 = vpop.f32.mrf.mxu0
      %v425 = vadd.f32 %v284, %v424
      %v426 = vpop.f32.mrf.mxu0
      %v427 = vadd.f32 %v288, %v426
      %428 = vdwg.mxu0
      %v429 = vld [vmem:[%s2] sm:$0xff]
      %v430 = vld [vmem:[%s2 + $0x8] sm:$0xff]
      %v431 = vld [vmem:[%s2 + $0x10] sm:$0xff]
      %v432 = vld [vmem:[%s2 + $0x18] sm:$0xff]
      %v433 = vld [vmem:[%s2 + $0x20] sm:$0xff]
      %v434 = vld [vmem:[%s2 + $0x28] sm:$0xff]
      %v435 = vld [vmem:[%s2 + $0x30] sm:$0xff]
      %v436 = vld [vmem:[%s2 + $0x38] sm:$0xff]
      %v437 = vld [vmem:[%s2 + $0x40] sm:$0xff]
      %v438 = vld [vmem:[%s2 + $0x48] sm:$0xff]
      %v439 = vld [vmem:[%s2 + $0x50] sm:$0xff]
      %v440 = vld [vmem:[%s2 + $0x58] sm:$0xff]
      %v441 = vld [vmem:[%s2 + $0x60] sm:$0xff]
      %v442 = vld [vmem:[%s2 + $0x68] sm:$0xff]
      %v443 = vld [vmem:[%s2 + $0x70] sm:$0xff]
      %v444 = vld [vmem:[%s2 + $0x78] sm:$0xff]
      %v445 = vlaneseq
      %v446 = vand.u32 %v445, 127
      %v447 = vadd.s32 %v446, 128
      %vm448 = vcmp.ge.s32.totalorder %v446, 128
      %vm449 = vcmp.ge.s32.totalorder %v447, 128
      %vm450 = vcmp.lt.s32.totalorder %v446, 192
      %vm451 = vcmp.lt.s32.totalorder %v447, 192
      %vm452 = vmand %vm448, %vm450
      %vm453 = vmand %vm449, %vm451
      %v454 = vsel %vm452, 2.0, 1.0
      %v455 = vsel %vm453, 2.0, 1.0
      %v456 = vsel %vm452, -1.0, 0.0
      %v457 = vsel %vm453, -1.0, 0.0
      %v459 = vsel %vm291, 0.0, 0
      %461 = vmatprep.subr.mxu0 0.0
      %462 = vmatpush1.msra.mxu0 0.0
      %463 = vmatprep.subr.mxu0 0.0
      %464 = vmatpush1.msra.mxu0 0.0
      %465 = vmatprep.subr.mxu0 0.0
      %466 = vmatpush1.msra.mxu0 0.0
      %467 = vmatprep.subr.mxu0 0.0
      %468 = vmatpush1.msra.mxu0 0.0
      %469 = vmatprep.subr.mxu0 0.0
      %470 = vmatpush1.msra.mxu0 0.0
      %471 = vmatprep.subr.mxu0 0.0
      %472 = vmatpush1.msra.mxu0 0.0
      %473 = vmatprep.subr.mxu0 0.0
      %474 = vmatpush1.msra.mxu0 0.0
      %475 = vmatprep.subr.mxu0 0.0
      %476 = vmatpush1.msra.mxu0 0.0
      %477 = vmatprep.subr.mxu0 %v444
      %478 = vmatpush1.msra.mxu0 %v443
      %479 = vmatprep.subr.mxu0 %v442
      %480 = vmatpush1.msra.mxu0 %v441
      %481 = vmatprep.subr.mxu0 %v440
      %482 = vmatpush1.msra.mxu0 %v439
      %483 = vmatprep.subr.mxu0 %v438
      %484 = vmatpush1.msra.mxu0 %v437
      %485 = vmatprep.subr.mxu0 %v436
      %486 = vmatpush1.msra.mxu0 %v435
      %487 = vmatprep.subr.mxu0 %v434
      %488 = vmatpush1.msra.mxu0 %v433
      %489 = vmatprep.subr.mxu0 %v432
      %490 = vmatpush1.msra.mxu0 %v431
      %491 = vmatprep.subr.mxu0 %v430
      %492 = vmatpush1.msra.mxu0 %v429
      %493 = vmatprep.subr.mxu0 0.0
      %494 = vmatpush2.msra.mxu0 0.0
      %495 = vmatprep.subr.mxu0 0.0
      %496 = vmatpush2.msra.mxu0 0.0
      %497 = vmatprep.subr.mxu0 0.0
      %498 = vmatpush2.msra.mxu0 0.0
      %499 = vmatprep.subr.mxu0 0.0
      %500 = vmatpush2.msra.mxu0 0.0
      %501 = vmatprep.subr.mxu0 0.0
      %502 = vmatpush2.msra.mxu0 0.0
      %503 = vmatprep.subr.mxu0 0.0
      %504 = vmatpush2.msra.mxu0 0.0
      %505 = vmatprep.subr.mxu0 0.0
      %506 = vmatpush2.msra.mxu0 0.0
      %507 = vmatprep.subr.mxu0 0.0
      %508 = vmatpush2.msra.mxu0 0.0
      %509 = vmatprep.subr.mxu0 0.0
      %510 = vmatpush2.msra.mxu0 0.0
      %511 = vmatprep.subr.mxu0 0.0
      %512 = vmatpush2.msra.mxu0 0.0
      %513 = vmatprep.subr.mxu0 0.0
      %514 = vmatpush2.msra.mxu0 0.0
      %515 = vmatprep.subr.mxu0 0.0
      %516 = vmatpush2.msra.mxu0 0.0
      %517 = vmatprep.subr.mxu0 0.0
      %518 = vmatpush2.msra.mxu0 0.0
      %519 = vmatprep.subr.mxu0 0.0
      %520 = vmatpush2.msra.mxu0 0.0
      %521 = vmatprep.subr.mxu0 0.0
      %522 = vmatpush2.msra.mxu0 0.0
      %523 = vmatprep.subr.mxu0 0.0
      %524 = vmatpush2.msra.mxu0 0.0
      %525 = vmatprep.mubr.f32.mxu0 0.0
      %526 = vmatmul.mubr.f32.gmra.mxu0 %v459
      %v527 = vpop.f32.mrf.mxu0
      %v528 = vadd.f32 0.0, %v527
      %v529 = vpop.f32.mrf.mxu0
      %v530 = vadd.f32 0.0, %v529
      %531 = vdwg.mxu0
      %v532 = vadd.f32 %v383, %v528
      %v533 = vadd.f32 %v385, %v530
      %v534 = vxor.u32 %v532, 2147483648
      %v535 = vxor.u32 %v533, 2147483648
      %v536 = vmul.f32 %v534, 1.442695
      %v537 = vpow.pop %v536
      %v538 = vmul.f32 %v535, 1.442695
      %v539 = vpow.pop %v538
      %v540 = vadd.f32 %v537, 1.0
      %v541 = vadd.f32 %v539, 1.0
      %v542 = vrcp.pop %v540
      %v543 = vmul.f32 1.0, %v542
      %v544 = vrcp.pop %v541
      %v545 = vmul.f32 1.0, %v544
      %v546 = vmul.f32 %v543, %v454
      %v547 = vmul.f32 %v545, %v455
      %v548 = vadd.f32 %v546, %v456
      %v549 = vadd.f32 %v547, %v457
      %v550 = vmul.f32 %v548, 0.0
      %v551 = vmul.f32 %v548, %v549
      %553 = vrot.lane.b32.xlu0 %v551, 64
      %v554 = vpop.permute.xlu0 %553
      %v556 = vadd.f32 %v550, %v554
      %v557 = vtanh.pop %v556
      %v558 = vmul.f32 %v549, %v557
      %560 = vrot.lane.b32.xlu0 %v558, 64
      %v561 = vpop.permute.xlu0 %560
      %v562 = vsel %vm291, %v561, 0
      %564 = vmatprep.subr.mxu0 0.0
      %565 = vmatpush1.msra.mxu0 0.0
      %566 = vmatprep.subr.mxu0 0.0
      %567 = vmatpush1.msra.mxu0 0.0
      %568 = vmatprep.subr.mxu0 0.0
      %569 = vmatpush1.msra.mxu0 0.0
      %570 = vmatprep.subr.mxu0 0.0
      %571 = vmatpush1.msra.mxu0 0.0
      %572 = vmatprep.subr.mxu0 0.0
      %573 = vmatpush1.msra.mxu0 0.0
      %574 = vmatprep.subr.mxu0 0.0
      %575 = vmatpush1.msra.mxu0 0.0
      %576 = vmatprep.subr.mxu0 0.0
      %577 = vmatpush1.msra.mxu0 0.0
      %578 = vmatprep.subr.mxu0 0.0
      %579 = vmatpush1.msra.mxu0 0.0
      %580 = vmatprep.subr.mxu0 %v444
      %581 = vmatpush1.msra.mxu0 %v443
      %582 = vmatprep.subr.mxu0 %v442
      %583 = vmatpush1.msra.mxu0 %v441
      %584 = vmatprep.subr.mxu0 %v440
      %585 = vmatpush1.msra.mxu0 %v439
      %586 = vmatprep.subr.mxu0 %v438
      %587 = vmatpush1.msra.mxu0 %v437
      %588 = vmatprep.subr.mxu0 %v436
      %589 = vmatpush1.msra.mxu0 %v435
      %590 = vmatprep.subr.mxu0 %v434
      %591 = vmatpush1.msra.mxu0 %v433
      %592 = vmatprep.subr.mxu0 %v432
      %593 = vmatpush1.msra.mxu0 %v431
      %594 = vmatprep.subr.mxu0 %v430
      %595 = vmatpush1.msra.mxu0 %v429
      %596 = vmatprep.subr.mxu0 0.0
      %597 = vmatpush2.msra.mxu0 0.0
      %598 = vmatprep.subr.mxu0 0.0
      %599 = vmatpush2.msra.mxu0 0.0
      %600 = vmatprep.subr.mxu0 0.0
      %601 = vmatpush2.msra.mxu0 0.0
      %602 = vmatprep.subr.mxu0 0.0
      %603 = vmatpush2.msra.mxu0 0.0
      %604 = vmatprep.subr.mxu0 0.0
      %605 = vmatpush2.msra.mxu0 0.0
      %606 = vmatprep.subr.mxu0 0.0
      %607 = vmatpush2.msra.mxu0 0.0
      %608 = vmatprep.subr.mxu0 0.0
      %609 = vmatpush2.msra.mxu0 0.0
      %610 = vmatprep.subr.mxu0 0.0
      %611 = vmatpush2.msra.mxu0 0.0
      %612 = vmatprep.subr.mxu0 0.0
      %613 = vmatpush2.msra.mxu0 0.0
      %614 = vmatprep.subr.mxu0 0.0
      %615 = vmatpush2.msra.mxu0 0.0
      %616 = vmatprep.subr.mxu0 0.0
      %617 = vmatpush2.msra.mxu0 0.0
      %618 = vmatprep.subr.mxu0 0.0
      %619 = vmatpush2.msra.mxu0 0.0
      %620 = vmatprep.subr.mxu0 0.0
      %621 = vmatpush2.msra.mxu0 0.0
      %622 = vmatprep.subr.mxu0 0.0
      %623 = vmatpush2.msra.mxu0 0.0
      %624 = vmatprep.subr.mxu0 0.0
      %625 = vmatpush2.msra.mxu0 0.0
      %626 = vmatprep.subr.mxu0 0.0
      %627 = vmatpush2.msra.mxu0 0.0
      %628 = vmatprep.mubr.f32.mxu0 0.0
      %629 = vmatmul.mubr.f32.gmra.mxu0 %v562
      %v630 = vpop.f32.mrf.mxu0
      %v631 = vadd.f32 0.0, %v630
      %v632 = vpop.f32.mrf.mxu0
      %v633 = vadd.f32 0.0, %v632
      %634 = vdwg.mxu0
      %v635 = vadd.f32 %v389, %v631
      %v636 = vadd.f32 %v391, %v633
      %v637 = vxor.u32 %v635, 2147483648
      %v638 = vxor.u32 %v636, 2147483648
      %v639 = vmul.f32 %v637, 1.442695
      %v640 = vpow.pop %v639
      %v641 = vmul.f32 %v638, 1.442695
      %v642 = vpow.pop %v641
      %v643 = vadd.f32 %v640, 1.0
      %v644 = vadd.f32 %v642, 1.0
      %v645 = vrcp.pop %v643
      %v646 = vmul.f32 1.0, %v645
      %v647 = vrcp.pop %v644
      %v648 = vmul.f32 1.0, %v647
      %v649 = vmul.f32 %v646, %v454
      %v650 = vmul.f32 %v648, %v455
      %v651 = vadd.f32 %v649, %v456
      %v652 = vadd.f32 %v650, %v457
      %v653 = vmul.f32 %v651, %v556
      %v654 = vmul.f32 %v651, %v652
      %656 = vrot.lane.b32.xlu0 %v654, 64
      %v657 = vpop.permute.xlu0 %656
      %v659 = vadd.f32 %v653, %v657
      %v660 = vtanh.pop %v659
      %v661 = vmul.f32 %v652, %v660
      %663 = vrot.lane.b32.xlu0 %v661, 64
      %v664 = vpop.permute.xlu0 %663
      %v665 = vsel %vm291, %v664, 0
      %667 = vmatprep.subr.mxu0 0.0
      %668 = vmatpush1.msra.mxu0 0.0
      %669 = vmatprep.subr.mxu0 0.0
      %670 = vmatpush1.msra.mxu0 0.0
      %671 = vmatprep.subr.mxu0 0.0
      %672 = vmatpush1.msra.mxu0 0.0
      %673 = vmatprep.subr.mxu0 0.0
      %674 = vmatpush1.msra.mxu0 0.0
      %675 = vmatprep.subr.mxu0 0.0
      %676 = vmatpush1.msra.mxu0 0.0
      %677 = vmatprep.subr.mxu0 0.0
      %678 = vmatpush1.msra.mxu0 0.0
      %679 = vmatprep.subr.mxu0 0.0
      %680 = vmatpush1.msra.mxu0 0.0
      %681 = vmatprep.subr.mxu0 0.0
      %682 = vmatpush1.msra.mxu0 0.0
      %683 = vmatprep.subr.mxu0 %v444
      %684 = vmatpush1.msra.mxu0 %v443
      %685 = vmatprep.subr.mxu0 %v442
      %686 = vmatpush1.msra.mxu0 %v441
      %687 = vmatprep.subr.mxu0 %v440
      %688 = vmatpush1.msra.mxu0 %v439
      %689 = vmatprep.subr.mxu0 %v438
      %690 = vmatpush1.msra.mxu0 %v437
      %691 = vmatprep.subr.mxu0 %v436
      %692 = vmatpush1.msra.mxu0 %v435
      %693 = vmatprep.subr.mxu0 %v434
      %694 = vmatpush1.msra.mxu0 %v433
      %695 = vmatprep.subr.mxu0 %v432
      %696 = vmatpush1.msra.mxu0 %v431
      %697 = vmatprep.subr.mxu0 %v430
      %698 = vmatpush1.msra.mxu0 %v429
      %699 = vmatprep.subr.mxu0 0.0
      %700 = vmatpush2.msra.mxu0 0.0
      %701 = vmatprep.subr.mxu0 0.0
      %702 = vmatpush2.msra.mxu0 0.0
      %703 = vmatprep.subr.mxu0 0.0
      %704 = vmatpush2.msra.mxu0 0.0
      %705 = vmatprep.subr.mxu0 0.0
      %706 = vmatpush2.msra.mxu0 0.0
      %707 = vmatprep.subr.mxu0 0.0
      %708 = vmatpush2.msra.mxu0 0.0
      %709 = vmatprep.subr.mxu0 0.0
      %710 = vmatpush2.msra.mxu0 0.0
      %711 = vmatprep.subr.mxu0 0.0
      %712 = vmatpush2.msra.mxu0 0.0
      %713 = vmatprep.subr.mxu0 0.0
      %714 = vmatpush2.msra.mxu0 0.0
      %715 = vmatprep.subr.mxu0 0.0
      %716 = vmatpush2.msra.mxu0 0.0
      %717 = vmatprep.subr.mxu0 0.0
      %718 = vmatpush2.msra.mxu0 0.0
      %719 = vmatprep.subr.mxu0 0.0
      %720 = vmatpush2.msra.mxu0 0.0
      %721 = vmatprep.subr.mxu0 0.0
      %722 = vmatpush2.msra.mxu0 0.0
      %723 = vmatprep.subr.mxu0 0.0
      %724 = vmatpush2.msra.mxu0 0.0
      %725 = vmatprep.subr.mxu0 0.0
      %726 = vmatpush2.msra.mxu0 0.0
      %727 = vmatprep.subr.mxu0 0.0
      %728 = vmatpush2.msra.mxu0 0.0
      %729 = vmatprep.subr.mxu0 0.0
      %730 = vmatpush2.msra.mxu0 0.0
      %731 = vmatprep.mubr.f32.mxu0 0.0
      %732 = vmatmul.mubr.f32.gmra.mxu0 %v665
      %v733 = vpop.f32.mrf.mxu0
      %v734 = vadd.f32 0.0, %v733
      %v735 = vpop.f32.mrf.mxu0
      %v736 = vadd.f32 0.0, %v735
      %737 = vdwg.mxu0
      %v738 = vadd.f32 %v395, %v734
      %v739 = vadd.f32 %v397, %v736
      %v740 = vxor.u32 %v738, 2147483648
      %v741 = vxor.u32 %v739, 2147483648
      %v742 = vmul.f32 %v740, 1.442695
      %v743 = vpow.pop %v742
      %v744 = vmul.f32 %v741, 1.442695
      %v745 = vpow.pop %v744
      %v746 = vadd.f32 %v743, 1.0
      %v747 = vadd.f32 %v745, 1.0
      %v748 = vrcp.pop %v746
      %v749 = vmul.f32 1.0, %v748
      %v750 = vrcp.pop %v747
      %v751 = vmul.f32 1.0, %v750
      %v752 = vmul.f32 %v749, %v454
      %v753 = vmul.f32 %v751, %v455
      %v754 = vadd.f32 %v752, %v456
      %v755 = vadd.f32 %v753, %v457
      %v756 = vmul.f32 %v754, %v659
      %v757 = vmul.f32 %v754, %v755
      %759 = vrot.lane.b32.xlu0 %v757, 64
      %v760 = vpop.permute.xlu0 %759
      %v762 = vadd.f32 %v756, %v760
      %v763 = vtanh.pop %v762
      %v764 = vmul.f32 %v755, %v763
      %766 = vrot.lane.b32.xlu0 %v764, 64
      %v767 = vpop.permute.xlu0 %766
      %v768 = vsel %vm291, %v767, 0
      %770 = vmatprep.subr.mxu0 0.0
      %771 = vmatpush1.msra.mxu0 0.0
      %772 = vmatprep.subr.mxu0 0.0
      %773 = vmatpush1.msra.mxu0 0.0
      %774 = vmatprep.subr.mxu0 0.0
      %775 = vmatpush1.msra.mxu0 0.0
      %776 = vmatprep.subr.mxu0 0.0
      %777 = vmatpush1.msra.mxu0 0.0
      %778 = vmatprep.subr.mxu0 0.0
      %779 = vmatpush1.msra.mxu0 0.0
      %780 = vmatprep.subr.mxu0 0.0
      %781 = vmatpush1.msra.mxu0 0.0
      %782 = vmatprep.subr.mxu0 0.0
      %783 = vmatpush1.msra.mxu0 0.0
      %784 = vmatprep.subr.mxu0 0.0
      %785 = vmatpush1.msra.mxu0 0.0
      %786 = vmatprep.subr.mxu0 %v444
      %787 = vmatpush1.msra.mxu0 %v443
      %788 = vmatprep.subr.mxu0 %v442
      %789 = vmatpush1.msra.mxu0 %v441
      %790 = vmatprep.subr.mxu0 %v440
      %791 = vmatpush1.msra.mxu0 %v439
      %792 = vmatprep.subr.mxu0 %v438
      %793 = vmatpush1.msra.mxu0 %v437
      %794 = vmatprep.subr.mxu0 %v436
      %795 = vmatpush1.msra.mxu0 %v435
      %796 = vmatprep.subr.mxu0 %v434
      %797 = vmatpush1.msra.mxu0 %v433
      %798 = vmatprep.subr.mxu0 %v432
      %799 = vmatpush1.msra.mxu0 %v431
      %800 = vmatprep.subr.mxu0 %v430
      %801 = vmatpush1.msra.mxu0 %v429
      %802 = vmatprep.subr.mxu0 0.0
      %803 = vmatpush2.msra.mxu0 0.0
      %804 = vmatprep.subr.mxu0 0.0
      %805 = vmatpush2.msra.mxu0 0.0
      %806 = vmatprep.subr.mxu0 0.0
      %807 = vmatpush2.msra.mxu0 0.0
      %808 = vmatprep.subr.mxu0 0.0
      %809 = vmatpush2.msra.mxu0 0.0
      %810 = vmatprep.subr.mxu0 0.0
      %811 = vmatpush2.msra.mxu0 0.0
      %812 = vmatprep.subr.mxu0 0.0
      %813 = vmatpush2.msra.mxu0 0.0
      %814 = vmatprep.subr.mxu0 0.0
      %815 = vmatpush2.msra.mxu0 0.0
      %816 = vmatprep.subr.mxu0 0.0
      %817 = vmatpush2.msra.mxu0 0.0
      %818 = vmatprep.subr.mxu0 0.0
      %819 = vmatpush2.msra.mxu0 0.0
      %820 = vmatprep.subr.mxu0 0.0
      %821 = vmatpush2.msra.mxu0 0.0
      %822 = vmatprep.subr.mxu0 0.0
      %823 = vmatpush2.msra.mxu0 0.0
      %824 = vmatprep.subr.mxu0 0.0
      %825 = vmatpush2.msra.mxu0 0.0
      %826 = vmatprep.subr.mxu0 0.0
      %827 = vmatpush2.msra.mxu0 0.0
      %828 = vmatprep.subr.mxu0 0.0
      %829 = vmatpush2.msra.mxu0 0.0
      %830 = vmatprep.subr.mxu0 0.0
      %831 = vmatpush2.msra.mxu0 0.0
      %832 = vmatprep.subr.mxu0 0.0
      %833 = vmatpush2.msra.mxu0 0.0
      %834 = vmatprep.mubr.f32.mxu0 0.0
      %835 = vmatmul.mubr.f32.gmra.mxu0 %v768
      %v836 = vpop.f32.mrf.mxu0
      %v837 = vadd.f32 0.0, %v836
      %v838 = vpop.f32.mrf.mxu0
      %v839 = vadd.f32 0.0, %v838
      %840 = vdwg.mxu0
      %v841 = vadd.f32 %v401, %v837
      %v842 = vadd.f32 %v403, %v839
      %v843 = vxor.u32 %v841, 2147483648
      %v844 = vxor.u32 %v842, 2147483648
      %v845 = vmul.f32 %v843, 1.442695
      %v846 = vpow.pop %v845
      %v847 = vmul.f32 %v844, 1.442695
      %v848 = vpow.pop %v847
      %v849 = vadd.f32 %v846, 1.0
      %v850 = vadd.f32 %v848, 1.0
      %v851 = vrcp.pop %v849
      %v852 = vmul.f32 1.0, %v851
      %v853 = vrcp.pop %v850
      %v854 = vmul.f32 1.0, %v853
      %v855 = vmul.f32 %v852, %v454
      %v856 = vmul.f32 %v854, %v455
      %v857 = vadd.f32 %v855, %v456
      %v858 = vadd.f32 %v856, %v457
      %v859 = vmul.f32 %v857, %v762
      %v860 = vmul.f32 %v857, %v858
      %862 = vrot.lane.b32.xlu0 %v860, 64
      %v863 = vpop.permute.xlu0 %862
      %v865 = vadd.f32 %v859, %v863
      %v866 = vtanh.pop %v865
      %v867 = vmul.f32 %v858, %v866
      %869 = vrot.lane.b32.xlu0 %v867, 64
      %v870 = vpop.permute.xlu0 %869
      %v871 = vsel %vm291, %v870, 0
      %873 = vmatprep.subr.mxu0 0.0
      %874 = vmatpush1.msra.mxu0 0.0
      %875 = vmatprep.subr.mxu0 0.0
      %876 = vmatpush1.msra.mxu0 0.0
      %877 = vmatprep.subr.mxu0 0.0
      %878 = vmatpush1.msra.mxu0 0.0
      %879 = vmatprep.subr.mxu0 0.0
      %880 = vmatpush1.msra.mxu0 0.0
      %881 = vmatprep.subr.mxu0 0.0
      %882 = vmatpush1.msra.mxu0 0.0
      %883 = vmatprep.subr.mxu0 0.0
      %884 = vmatpush1.msra.mxu0 0.0
      %885 = vmatprep.subr.mxu0 0.0
      %886 = vmatpush1.msra.mxu0 0.0
      %887 = vmatprep.subr.mxu0 0.0
      %888 = vmatpush1.msra.mxu0 0.0
      %889 = vmatprep.subr.mxu0 %v444
      %890 = vmatpush1.msra.mxu0 %v443
      %891 = vmatprep.subr.mxu0 %v442
      %892 = vmatpush1.msra.mxu0 %v441
      %893 = vmatprep.subr.mxu0 %v440
      %894 = vmatpush1.msra.mxu0 %v439
      %895 = vmatprep.subr.mxu0 %v438
      %896 = vmatpush1.msra.mxu0 %v437
      %897 = vmatprep.subr.mxu0 %v436
      %898 = vmatpush1.msra.mxu0 %v435
      %899 = vmatprep.subr.mxu0 %v434
      %900 = vmatpush1.msra.mxu0 %v433
      %901 = vmatprep.subr.mxu0 %v432
      %902 = vmatpush1.msra.mxu0 %v431
      %903 = vmatprep.subr.mxu0 %v430
      %904 = vmatpush1.msra.mxu0 %v429
      %905 = vmatprep.subr.mxu0 0.0
      %906 = vmatpush2.msra.mxu0 0.0
      %907 = vmatprep.subr.mxu0 0.0
      %908 = vmatpush2.msra.mxu0 0.0
      %909 = vmatprep.subr.mxu0 0.0
      %910 = vmatpush2.msra.mxu0 0.0
      %911 = vmatprep.subr.mxu0 0.0
      %912 = vmatpush2.msra.mxu0 0.0
      %913 = vmatprep.subr.mxu0 0.0
      %914 = vmatpush2.msra.mxu0 0.0
      %915 = vmatprep.subr.mxu0 0.0
      %916 = vmatpush2.msra.mxu0 0.0
      %917 = vmatprep.subr.mxu0 0.0
      %918 = vmatpush2.msra.mxu0 0.0
      %919 = vmatprep.subr.mxu0 0.0
      %920 = vmatpush2.msra.mxu0 0.0
      %921 = vmatprep.subr.mxu0 0.0
      %922 = vmatpush2.msra.mxu0 0.0
      %923 = vmatprep.subr.mxu0 0.0
      %924 = vmatpush2.msra.mxu0 0.0
      %925 = vmatprep.subr.mxu0 0.0
      %926 = vmatpush2.msra.mxu0 0.0
      %927 = vmatprep.subr.mxu0 0.0
      %928 = vmatpush2.msra.mxu0 0.0
      %929 = vmatprep.subr.mxu0 0.0
      %930 = vmatpush2.msra.mxu0 0.0
      %931 = vmatprep.subr.mxu0 0.0
      %932 = vmatpush2.msra.mxu0 0.0
      %933 = vmatprep.subr.mxu0 0.0
      %934 = vmatpush2.msra.mxu0 0.0
      %935 = vmatprep.subr.mxu0 0.0
      %936 = vmatpush2.msra.mxu0 0.0
      %937 = vmatprep.mubr.f32.mxu0 0.0
      %938 = vmatmul.mubr.f32.gmra.mxu0 %v871
      %v939 = vpop.f32.mrf.mxu0
      %v940 = vadd.f32 0.0, %v939
      %v941 = vpop.f32.mrf.mxu0
      %v942 = vadd.f32 0.0, %v941
      %943 = vdwg.mxu0
      %v944 = vadd.f32 %v407, %v940
      %v945 = vadd.f32 %v409, %v942
      %v946 = vxor.u32 %v944, 2147483648
      %v947 = vxor.u32 %v945, 2147483648
      %v948 = vmul.f32 %v946, 1.442695
      %v949 = vpow.pop %v948
      %v950 = vmul.f32 %v947, 1.442695
      %v951 = vpow.pop %v950
      %v952 = vadd.f32 %v949, 1.0
      %v953 = vadd.f32 %v951, 1.0
      %v954 = vrcp.pop %v952
      %v955 = vmul.f32 1.0, %v954
      %v956 = vrcp.pop %v953
      %v957 = vmul.f32 1.0, %v956
      %v958 = vmul.f32 %v955, %v454
      %v959 = vmul.f32 %v957, %v455
      %v960 = vadd.f32 %v958, %v456
      %v961 = vadd.f32 %v959, %v457
      %v962 = vmul.f32 %v960, %v865
      %v963 = vmul.f32 %v960, %v961
      %965 = vrot.lane.b32.xlu0 %v963, 64
      %v966 = vpop.permute.xlu0 %965
      %v968 = vadd.f32 %v962, %v966
      %v969 = vtanh.pop %v968
      %v970 = vmul.f32 %v961, %v969
      %972 = vrot.lane.b32.xlu0 %v970, 64
      %v973 = vpop.permute.xlu0 %972
      %v974 = vsel %vm291, %v973, 0
      %976 = vmatprep.subr.mxu0 0.0
      %977 = vmatpush1.msra.mxu0 0.0
      %978 = vmatprep.subr.mxu0 0.0
      %979 = vmatpush1.msra.mxu0 0.0
      %980 = vmatprep.subr.mxu0 0.0
      %981 = vmatpush1.msra.mxu0 0.0
      %982 = vmatprep.subr.mxu0 0.0
      %983 = vmatpush1.msra.mxu0 0.0
      %984 = vmatprep.subr.mxu0 0.0
      %985 = vmatpush1.msra.mxu0 0.0
      %986 = vmatprep.subr.mxu0 0.0
      %987 = vmatpush1.msra.mxu0 0.0
      %988 = vmatprep.subr.mxu0 0.0
      %989 = vmatpush1.msra.mxu0 0.0
      %990 = vmatprep.subr.mxu0 0.0
      %991 = vmatpush1.msra.mxu0 0.0
      %992 = vmatprep.subr.mxu0 %v444
      %993 = vmatpush1.msra.mxu0 %v443
      %994 = vmatprep.subr.mxu0 %v442
      %995 = vmatpush1.msra.mxu0 %v441
      %996 = vmatprep.subr.mxu0 %v440
      %997 = vmatpush1.msra.mxu0 %v439
      %998 = vmatprep.subr.mxu0 %v438
      %999 = vmatpush1.msra.mxu0 %v437
      %1000 = vmatprep.subr.mxu0 %v436
      %1001 = vmatpush1.msra.mxu0 %v435
      %1002 = vmatprep.subr.mxu0 %v434
      %1003 = vmatpush1.msra.mxu0 %v433
      %1004 = vmatprep.subr.mxu0 %v432
      %1005 = vmatpush1.msra.mxu0 %v431
      %1006 = vmatprep.subr.mxu0 %v430
      %1007 = vmatpush1.msra.mxu0 %v429
      %1008 = vmatprep.subr.mxu0 0.0
      %1009 = vmatpush2.msra.mxu0 0.0
      %1010 = vmatprep.subr.mxu0 0.0
      %1011 = vmatpush2.msra.mxu0 0.0
      %1012 = vmatprep.subr.mxu0 0.0
      %1013 = vmatpush2.msra.mxu0 0.0
      %1014 = vmatprep.subr.mxu0 0.0
      %1015 = vmatpush2.msra.mxu0 0.0
      %1016 = vmatprep.subr.mxu0 0.0
      %1017 = vmatpush2.msra.mxu0 0.0
      %1018 = vmatprep.subr.mxu0 0.0
      %1019 = vmatpush2.msra.mxu0 0.0
      %1020 = vmatprep.subr.mxu0 0.0
      %1021 = vmatpush2.msra.mxu0 0.0
      %1022 = vmatprep.subr.mxu0 0.0
      %1023 = vmatpush2.msra.mxu0 0.0
      %1024 = vmatprep.subr.mxu0 0.0
      %1025 = vmatpush2.msra.mxu0 0.0
      %1026 = vmatprep.subr.mxu0 0.0
      %1027 = vmatpush2.msra.mxu0 0.0
      %1028 = vmatprep.subr.mxu0 0.0
      %1029 = vmatpush2.msra.mxu0 0.0
      %1030 = vmatprep.subr.mxu0 0.0
      %1031 = vmatpush2.msra.mxu0 0.0
      %1032 = vmatprep.subr.mxu0 0.0
      %1033 = vmatpush2.msra.mxu0 0.0
      %1034 = vmatprep.subr.mxu0 0.0
      %1035 = vmatpush2.msra.mxu0 0.0
      %1036 = vmatprep.subr.mxu0 0.0
      %1037 = vmatpush2.msra.mxu0 0.0
      %1038 = vmatprep.subr.mxu0 0.0
      %1039 = vmatpush2.msra.mxu0 0.0
      %1040 = vmatprep.mubr.f32.mxu0 0.0
      %1041 = vmatmul.mubr.f32.gmra.mxu0 %v974
      %v1042 = vpop.f32.mrf.mxu0
      %v1043 = vadd.f32 0.0, %v1042
      %v1044 = vpop.f32.mrf.mxu0
      %v1045 = vadd.f32 0.0, %v1044
      %1046 = vdwg.mxu0
      %v1047 = vadd.f32 %v413, %v1043
      %v1048 = vadd.f32 %v415, %v1045
      %v1049 = vxor.u32 %v1047, 2147483648
      %v1050 = vxor.u32 %v1048, 2147483648
      %v1051 = vmul.f32 %v1049, 1.442695
      %v1052 = vpow.pop %v1051
      %v1053 = vmul.f32 %v1050, 1.442695
      %v1054 = vpow.pop %v1053
      %v1055 = vadd.f32 %v1052, 1.0
      %v1056 = vadd.f32 %v1054, 1.0
      %v1057 = vrcp.pop %v1055
      %v1058 = vmul.f32 1.0, %v1057
      %v1059 = vrcp.pop %v1056
      %v1060 = vmul.f32 1.0, %v1059
      %v1061 = vmul.f32 %v1058, %v454
      %v1062 = vmul.f32 %v1060, %v455
      %v1063 = vadd.f32 %v1061, %v456
      %v1064 = vadd.f32 %v1062, %v457
      %v1065 = vmul.f32 %v1063, %v968
      %v1066 = vmul.f32 %v1063, %v1064
      %1068 = vrot.lane.b32.xlu0 %v1066, 64
      %v1069 = vpop.permute.xlu0 %1068
      %v1071 = vadd.f32 %v1065, %v1069
      %v1072 = vtanh.pop %v1071
      %v1073 = vmul.f32 %v1064, %v1072
      %1075 = vrot.lane.b32.xlu0 %v1073, 64
      %v1076 = vpop.permute.xlu0 %1075
      %v1077 = vsel %vm291, %v1076, 0
      %1079 = vmatprep.subr.mxu0 0.0
      %1080 = vmatpush1.msra.mxu0 0.0
      %1081 = vmatprep.subr.mxu0 0.0
      %1082 = vmatpush1.msra.mxu0 0.0
      %1083 = vmatprep.subr.mxu0 0.0
      %1084 = vmatpush1.msra.mxu0 0.0
      %1085 = vmatprep.subr.mxu0 0.0
      %1086 = vmatpush1.msra.mxu0 0.0
      %1087 = vmatprep.subr.mxu0 0.0
      %1088 = vmatpush1.msra.mxu0 0.0
      %1089 = vmatprep.subr.mxu0 0.0
      %1090 = vmatpush1.msra.mxu0 0.0
      %1091 = vmatprep.subr.mxu0 0.0
      %1092 = vmatpush1.msra.mxu0 0.0
      %1093 = vmatprep.subr.mxu0 0.0
      %1094 = vmatpush1.msra.mxu0 0.0
      %1095 = vmatprep.subr.mxu0 %v444
      %1096 = vmatpush1.msra.mxu0 %v443
      %1097 = vmatprep.subr.mxu0 %v442
      %1098 = vmatpush1.msra.mxu0 %v441
      %1099 = vmatprep.subr.mxu0 %v440
      %1100 = vmatpush1.msra.mxu0 %v439
      %1101 = vmatprep.subr.mxu0 %v438
      %1102 = vmatpush1.msra.mxu0 %v437
      %1103 = vmatprep.subr.mxu0 %v436
      %1104 = vmatpush1.msra.mxu0 %v435
      %1105 = vmatprep.subr.mxu0 %v434
      %1106 = vmatpush1.msra.mxu0 %v433
      %1107 = vmatprep.subr.mxu0 %v432
      %1108 = vmatpush1.msra.mxu0 %v431
      %1109 = vmatprep.subr.mxu0 %v430
      %1110 = vmatpush1.msra.mxu0 %v429
      %1111 = vmatprep.subr.mxu0 0.0
      %1112 = vmatpush2.msra.mxu0 0.0
      %1113 = vmatprep.subr.mxu0 0.0
      %1114 = vmatpush2.msra.mxu0 0.0
      %1115 = vmatprep.subr.mxu0 0.0
      %1116 = vmatpush2.msra.mxu0 0.0
      %1117 = vmatprep.subr.mxu0 0.0
      %1118 = vmatpush2.msra.mxu0 0.0
      %1119 = vmatprep.subr.mxu0 0.0
      %1120 = vmatpush2.msra.mxu0 0.0
      %1121 = vmatprep.subr.mxu0 0.0
      %1122 = vmatpush2.msra.mxu0 0.0
      %1123 = vmatprep.subr.mxu0 0.0
      %1124 = vmatpush2.msra.mxu0 0.0
      %1125 = vmatprep.subr.mxu0 0.0
      %1126 = vmatpush2.msra.mxu0 0.0
      %1127 = vmatprep.subr.mxu0 0.0
      %1128 = vmatpush2.msra.mxu0 0.0
      %1129 = vmatprep.subr.mxu0 0.0
      %1130 = vmatpush2.msra.mxu0 0.0
      %1131 = vmatprep.subr.mxu0 0.0
      %1132 = vmatpush2.msra.mxu0 0.0
      %1133 = vmatprep.subr.mxu0 0.0
      %1134 = vmatpush2.msra.mxu0 0.0
      %1135 = vmatprep.subr.mxu0 0.0
      %1136 = vmatpush2.msra.mxu0 0.0
      %1137 = vmatprep.subr.mxu0 0.0
      %1138 = vmatpush2.msra.mxu0 0.0
      %1139 = vmatprep.subr.mxu0 0.0
      %1140 = vmatpush2.msra.mxu0 0.0
      %1141 = vmatprep.subr.mxu0 0.0
      %1142 = vmatpush2.msra.mxu0 0.0
      %1143 = vmatprep.mubr.f32.mxu0 0.0
      %1144 = vmatmul.mubr.f32.gmra.mxu0 %v1077
      %v1145 = vpop.f32.mrf.mxu0
      %v1146 = vadd.f32 0.0, %v1145
      %v1147 = vpop.f32.mrf.mxu0
      %v1148 = vadd.f32 0.0, %v1147
      %1149 = vdwg.mxu0
      %v1150 = vadd.f32 %v419, %v1146
      %v1151 = vadd.f32 %v421, %v1148
      %v1152 = vxor.u32 %v1150, 2147483648
      %v1153 = vxor.u32 %v1151, 2147483648
      %v1154 = vmul.f32 %v1152, 1.442695
      %v1155 = vpow.pop %v1154
      %v1156 = vmul.f32 %v1153, 1.442695
      %v1157 = vpow.pop %v1156
      %v1158 = vadd.f32 %v1155, 1.0
      %v1159 = vadd.f32 %v1157, 1.0
      %v1160 = vrcp.pop %v1158
      %v1161 = vmul.f32 1.0, %v1160
      %v1162 = vrcp.pop %v1159
      %v1163 = vmul.f32 1.0, %v1162
      %v1164 = vmul.f32 %v1161, %v454
      %v1165 = vmul.f32 %v1163, %v455
      %v1166 = vadd.f32 %v1164, %v456
      %v1167 = vadd.f32 %v1165, %v457
      %v1168 = vmul.f32 %v1166, %v1071
      %v1169 = vmul.f32 %v1166, %v1167
      %1171 = vrot.lane.b32.xlu0 %v1169, 64
      %v1172 = vpop.permute.xlu0 %1171
      %v1174 = vadd.f32 %v1168, %v1172
      %v1175 = vtanh.pop %v1174
      %v1176 = vmul.f32 %v1167, %v1175
      %1178 = vrot.lane.b32.xlu0 %v1176, 64
      %v1179 = vpop.permute.xlu0 %1178
      %v1180 = vsel %vm291, %v1179, 0
      %1182 = vmatprep.subr.mxu0 0.0
      %1183 = vmatpush1.msra.mxu0 0.0
      %1184 = vmatprep.subr.mxu0 0.0
      %1185 = vmatpush1.msra.mxu0 0.0
      %1186 = vmatprep.subr.mxu0 0.0
      %1187 = vmatpush1.msra.mxu0 0.0
      %1188 = vmatprep.subr.mxu0 0.0
      %1189 = vmatpush1.msra.mxu0 0.0
      %1190 = vmatprep.subr.mxu0 0.0
      %1191 = vmatpush1.msra.mxu0 0.0
      %1192 = vmatprep.subr.mxu0 0.0
      %1193 = vmatpush1.msra.mxu0 0.0
      %1194 = vmatprep.subr.mxu0 0.0
      %1195 = vmatpush1.msra.mxu0 0.0
      %1196 = vmatprep.subr.mxu0 0.0
      %1197 = vmatpush1.msra.mxu0 0.0
      %1198 = vmatprep.subr.mxu0 %v444
      %1199 = vmatpush1.msra.mxu0 %v443
      %1200 = vmatprep.subr.mxu0 %v442
      %1201 = vmatpush1.msra.mxu0 %v441
      %1202 = vmatprep.subr.mxu0 %v440
      %1203 = vmatpush1.msra.mxu0 %v439
      %1204 = vmatprep.subr.mxu0 %v438
      %1205 = vmatpush1.msra.mxu0 %v437
      %1206 = vmatprep.subr.mxu0 %v436
      %1207 = vmatpush1.msra.mxu0 %v435
      %1208 = vmatprep.subr.mxu0 %v434
      %1209 = vmatpush1.msra.mxu0 %v433
      %1210 = vmatprep.subr.mxu0 %v432
      %1211 = vmatpush1.msra.mxu0 %v431
      %1212 = vmatprep.subr.mxu0 %v430
      %1213 = vmatpush1.msra.mxu0 %v429
      %1214 = vmatprep.subr.mxu0 0.0
      %1215 = vmatpush2.msra.mxu0 0.0
      %1216 = vmatprep.subr.mxu0 0.0
      %1217 = vmatpush2.msra.mxu0 0.0
      %1218 = vmatprep.subr.mxu0 0.0
      %1219 = vmatpush2.msra.mxu0 0.0
      %1220 = vmatprep.subr.mxu0 0.0
      %1221 = vmatpush2.msra.mxu0 0.0
      %1222 = vmatprep.subr.mxu0 0.0
      %1223 = vmatpush2.msra.mxu0 0.0
      %1224 = vmatprep.subr.mxu0 0.0
      %1225 = vmatpush2.msra.mxu0 0.0
      %1226 = vmatprep.subr.mxu0 0.0
      %1227 = vmatpush2.msra.mxu0 0.0
      %1228 = vmatprep.subr.mxu0 0.0
      %1229 = vmatpush2.msra.mxu0 0.0
      %1230 = vmatprep.subr.mxu0 0.0
      %1231 = vmatpush2.msra.mxu0 0.0
      %1232 = vmatprep.subr.mxu0 0.0
      %1233 = vmatpush2.msra.mxu0 0.0
      %1234 = vmatprep.subr.mxu0 0.0
      %1235 = vmatpush2.msra.mxu0 0.0
      %1236 = vmatprep.subr.mxu0 0.0
      %1237 = vmatpush2.msra.mxu0 0.0
      %1238 = vmatprep.subr.mxu0 0.0
      %1239 = vmatpush2.msra.mxu0 0.0
      %1240 = vmatprep.subr.mxu0 0.0
      %1241 = vmatpush2.msra.mxu0 0.0
      %1242 = vmatprep.subr.mxu0 0.0
      %1243 = vmatpush2.msra.mxu0 0.0
      %1244 = vmatprep.subr.mxu0 0.0
      %1245 = vmatpush2.msra.mxu0 0.0
      %1246 = vmatprep.mubr.f32.mxu0 0.0
      %1247 = vmatmul.mubr.f32.gmra.mxu0 %v1180
      %v1248 = vpop.f32.mrf.mxu0
      %v1249 = vadd.f32 0.0, %v1248
      %v1250 = vpop.f32.mrf.mxu0
      %v1251 = vadd.f32 0.0, %v1250
      %1252 = vdwg.mxu0
      %v1253 = vadd.f32 %v425, %v1249
      %v1254 = vadd.f32 %v427, %v1251
      %v1255 = vxor.u32 %v1253, 2147483648
      %v1256 = vxor.u32 %v1254, 2147483648
      %v1257 = vmul.f32 %v1255, 1.442695
      %v1258 = vpow.pop %v1257
      %v1259 = vmul.f32 %v1256, 1.442695
      %v1260 = vpow.pop %v1259
      %v1261 = vadd.f32 %v1258, 1.0
      %v1262 = vadd.f32 %v1260, 1.0
      %v1263 = vrcp.pop %v1261
      %v1264 = vmul.f32 1.0, %v1263
      %v1265 = vrcp.pop %v1262
      %v1266 = vmul.f32 1.0, %v1265
      %v1267 = vmul.f32 %v1264, %v454
      %v1268 = vmul.f32 %v1266, %v455
      %v1269 = vadd.f32 %v1267, %v456
      %v1270 = vadd.f32 %v1268, %v457
      %v1271 = vmul.f32 %v1269, %v1174
      %v1272 = vmul.f32 %v1269, %v1270
      %1274 = vrot.lane.b32.xlu0 %v1272, 64
      %v1275 = vpop.permute.xlu0 %1274
      %v1277 = vadd.f32 %v1271, %v1275
      %v1278 = vtanh.pop %v1277
      %v1279 = vmul.f32 %v1270, %v1278
      %1282 = vrot.lane.b32.xlu0 %v1279, 64
      %v1283 = vpop.permute.xlu0 %1282
      %vm1285 = vcmask 261120
      %v1286 = vsel %vm1285, %v561, %v1283
      %v1289 = vsel %vm1285, %v664, %v1179
      %v1292 = vsel %vm1285, %v767, %v1076
      %v1295 = vsel %vm1285, %v870, %v973
      %v1296 = vsel %vm1285, %v973, %v870
      %v1297 = vsel %vm1285, %v1076, %v767
      %v1298 = vsel %vm1285, %v1179, %v664
      %v1299 = vsel %vm1285, %v1283, %v561
      %v1300 = vmax.f32 %v1286, 0.0
      %v1301 = vmax.f32 %v1289, 0.0
      %v1302 = vmax.f32 %v1292, 0.0
      %v1303 = vmax.f32 %v1295, 0.0
      %v1304 = vmax.f32 %v1296, 0.0
      %v1305 = vmax.f32 %v1297, 0.0
      %v1306 = vmax.f32 %v1298, 0.0
      %v1307 = vmax.f32 %v1299, 0.0
      %v1308 = vld [vmem:[%s4] sm:$0xff]
      %v1309 = vld [vmem:[%s4 + $0x8] sm:$0xff]
      %v1310 = vld [vmem:[%s4 + $0x10] sm:$0xff]
      %v1311 = vld [vmem:[%s4 + $0x18] sm:$0xff]
      %v1312 = vld [vmem:[%s4 + $0x20] sm:$0xff]
      %v1313 = vld [vmem:[%s4 + $0x28] sm:$0xff]
      %v1314 = vld [vmem:[%s4 + $0x30] sm:$0xff]
      %v1315 = vld [vmem:[%s4 + $0x38] sm:$0xff]
      %v1316 = vld [vmem:[%s5] sm:$0x1]
      %v1318 = vlaneseq
      %v1319 = vshrl.u32 %v1318, 7
      %v1320 = vsub.s32 0, %v1319
      %v1321 = vrot.slane %v1316, %v1320
      %v1324 = vsel %vm291, %v1300, 0
      %v1327 = vsel %vm291, %v1301, 0
      %v1330 = vsel %vm291, %v1302, 0
      %v1333 = vsel %vm291, %v1303, 0
      %v1336 = vsel %vm291, %v1304, 0
      %v1339 = vsel %vm291, %v1305, 0
      %v1342 = vsel %vm291, %v1306, 0
      %v1345 = vsel %vm291, %v1307, 0
      %1347 = vmatprep.subr.mxu0 0.0
      %1348 = vmatpush1.msra.mxu0 0.0
      %1349 = vmatprep.subr.mxu0 0.0
      %1350 = vmatpush1.msra.mxu0 0.0
      %1351 = vmatprep.subr.mxu0 0.0
      %1352 = vmatpush1.msra.mxu0 0.0
      %1353 = vmatprep.subr.mxu0 0.0
      %1354 = vmatpush1.msra.mxu0 0.0
      %1355 = vmatprep.subr.mxu0 0.0
      %1356 = vmatpush1.msra.mxu0 0.0
      %1357 = vmatprep.subr.mxu0 0.0
      %1358 = vmatpush1.msra.mxu0 0.0
      %1359 = vmatprep.subr.mxu0 0.0
      %1360 = vmatpush1.msra.mxu0 0.0
      %1361 = vmatprep.subr.mxu0 0.0
      %1362 = vmatpush1.msra.mxu0 0.0
      %1363 = vmatprep.subr.mxu0 0.0
      %1364 = vmatpush1.msra.mxu0 %v1315
      %1365 = vmatprep.subr.mxu0 0.0
      %1366 = vmatpush1.msra.mxu0 %v1314
      %1367 = vmatprep.subr.mxu0 0.0
      %1368 = vmatpush1.msra.mxu0 %v1313
      %1369 = vmatprep.subr.mxu0 0.0
      %1370 = vmatpush1.msra.mxu0 %v1312
      %1371 = vmatprep.subr.mxu0 0.0
      %1372 = vmatpush1.msra.mxu0 %v1311
      %1373 = vmatprep.subr.mxu0 0.0
      %1374 = vmatpush1.msra.mxu0 %v1310
      %1375 = vmatprep.subr.mxu0 0.0
      %1376 = vmatpush1.msra.mxu0 %v1309
      %1377 = vmatprep.subr.mxu0 0.0
      %1378 = vmatpush1.msra.mxu0 %v1308
      %1379 = vmatprep.subr.mxu0 0.0
      %1380 = vmatpush2.msra.mxu0 0.0
      %1381 = vmatprep.subr.mxu0 0.0
      %1382 = vmatpush2.msra.mxu0 0.0
      %1383 = vmatprep.subr.mxu0 0.0
      %1384 = vmatpush2.msra.mxu0 0.0
      %1385 = vmatprep.subr.mxu0 0.0
      %1386 = vmatpush2.msra.mxu0 0.0
      %1387 = vmatprep.subr.mxu0 0.0
      %1388 = vmatpush2.msra.mxu0 0.0
      %1389 = vmatprep.subr.mxu0 0.0
      %1390 = vmatpush2.msra.mxu0 0.0
      %1391 = vmatprep.subr.mxu0 0.0
      %1392 = vmatpush2.msra.mxu0 0.0
      %1393 = vmatprep.subr.mxu0 0.0
      %1394 = vmatpush2.msra.mxu0 0.0
      %1395 = vmatprep.subr.mxu0 0.0
      %1396 = vmatpush2.msra.mxu0 0.0
      %1397 = vmatprep.subr.mxu0 0.0
      %1398 = vmatpush2.msra.mxu0 0.0
      %1399 = vmatprep.subr.mxu0 0.0
      %1400 = vmatpush2.msra.mxu0 0.0
      %1401 = vmatprep.subr.mxu0 0.0
      %1402 = vmatpush2.msra.mxu0 0.0
      %1403 = vmatprep.subr.mxu0 0.0
      %1404 = vmatpush2.msra.mxu0 0.0
      %1405 = vmatprep.subr.mxu0 0.0
      %1406 = vmatpush2.msra.mxu0 0.0
      %1407 = vmatprep.subr.mxu0 0.0
      %1408 = vmatpush2.msra.mxu0 0.0
      %1409 = vmatprep.subr.mxu0 0.0
      %1410 = vmatpush2.msra.mxu0 0.0
      %1411 = vmatprep.mubr.f32.mxu0 0.0
      %1412 = vmatmul.mubr.f32.gmra.mxu0 %v1324
      %v1413 = vpop.f32.mrf.mxu0
      %v1414 = vadd.f32 %v1321, %v1413
      %v1415 = vpop.f32.mrf.mxu0
      %1416 = vmatprep.mubr.f32.mxu0 0.0
      %1417 = vmatmul.mubr.f32.gmra.mxu0 %v1327
      %v1418 = vpop.f32.mrf.mxu0
      %v1419 = vadd.f32 %v1321, %v1418
      %v1420 = vpop.f32.mrf.mxu0
      %1421 = vmatprep.mubr.f32.mxu0 0.0
      %1422 = vmatmul.mubr.f32.gmra.mxu0 %v1330
      %v1423 = vpop.f32.mrf.mxu0
      %v1424 = vadd.f32 %v1321, %v1423
      %v1425 = vpop.f32.mrf.mxu0
      %1426 = vmatprep.mubr.f32.mxu0 0.0
      %1427 = vmatmul.mubr.f32.gmra.mxu0 %v1333
      %v1428 = vpop.f32.mrf.mxu0
      %v1429 = vadd.f32 %v1321, %v1428
      %v1430 = vpop.f32.mrf.mxu0
      %1431 = vmatprep.mubr.f32.mxu0 0.0
      %1432 = vmatmul.mubr.f32.gmra.mxu0 %v1336
      %v1433 = vpop.f32.mrf.mxu0
      %v1434 = vadd.f32 %v1321, %v1433
      %v1435 = vpop.f32.mrf.mxu0
      %1436 = vmatprep.mubr.f32.mxu0 0.0
      %1437 = vmatmul.mubr.f32.gmra.mxu0 %v1339
      %v1438 = vpop.f32.mrf.mxu0
      %v1439 = vadd.f32 %v1321, %v1438
      %v1440 = vpop.f32.mrf.mxu0
      %1441 = vmatprep.mubr.f32.mxu0 0.0
      %1442 = vmatmul.mubr.f32.gmra.mxu0 %v1342
      %v1443 = vpop.f32.mrf.mxu0
      %v1444 = vadd.f32 %v1321, %v1443
      %v1445 = vpop.f32.mrf.mxu0
      %1446 = vmatprep.mubr.f32.mxu0 0.0
      %1447 = vmatmul.mubr.f32.gmra.mxu0 %v1345
      %v1448 = vpop.f32.mrf.mxu0
      %v1449 = vadd.f32 %v1321, %v1448
      %v1450 = vpop.f32.mrf.mxu0
      %1451 = vdwg.mxu0
      %1452 = vst [vmem:[%s253] sm:$0xff] %v1414
      %1453 = vst [vmem:[%s253 + $0x8] sm:$0xff] %v1419
      %1454 = vst [vmem:[%s253 + $0x10] sm:$0xff] %v1424
      %1455 = vst [vmem:[%s253 + $0x18] sm:$0xff] %v1429
      %1456 = vst [vmem:[%s253 + $0x20] sm:$0xff] %v1434
      %1457 = vst [vmem:[%s253 + $0x28] sm:$0xff] %v1439
      %1458 = vst [vmem:[%s253 + $0x30] sm:$0xff] %v1444
      %1459 = vst [vmem:[%s253 + $0x38] sm:$0xff] %v1449
      %s1460 = smul.u32 8, %s17
      %p1461 = scmp.lt.s32.totalorder %s1460, 15
      %s1462 = scalar_select %p1461, %s1460, 15
      %s1463 = smul.addr %s1462, 8
      %s1464 = scalar_lea.vmem %s6, %s1463
      // Predicated region
      $region45: #{ner_forward.1} parent=43 // pred_check
        %p1465 = pneg %p166
      $region46: #{ner_forward.1} parent=43 // pred_check_branch
        %1467 = sbr.rel (%p1465) target = $region48
      $region47: #{ner_forward.1} parent=43 // pred_region
        %s1468 = smul.u32 8, %s17
      $region48: #{ner_forward.1} parent=43 // pred_fallthru
        _
    $region44: #{ner_forward.1} parent=5 // pred_fallthru
      _
    %p1469 = scmp.le.s32.totalorder 2, %s12
    // Predicated region
    $region49: #{ner_forward.1} parent=5 // pred_check
      %p1470 = pneg %p1469
    $region50: #{ner_forward.1} parent=5 // pred_check_branch
      %1472 = sbr.rel (%p1470) target = $region52
    $region51: #{ner_forward.1} parent=5 // pred_region
      %s1473 = ssub.s32 %s12, 2
      // Predicated region
      $region53: #{ner_forward.1} parent=51 // pred_check
        %p1474 = pneg %p172
      $region54: #{ner_forward.1} parent=51 // pred_check_branch
        %1476 = sbr.rel (%p1474) target = $region56
      $region55: #{ner_forward.1} parent=51 // pred_region
        %s1477 = smul.u32 8, %s18
        %p1478 = scmp.lt.s32.totalorder %s1477, 15
        %s1479 = scalar_select %p1478, %s1477, 15
        %s1480 = smul.addr %s1479, 8
        %s1481 = scalar_lea.vmem %s6, %s1480
      $region56: #{ner_forward.1} parent=51 // pred_fallthru
        _
    $region52: #{ner_forward.1} parent=5 // pred_fallthru
      _
  $region6: #{ner_forward.1} parent=0 // loop_footer
    %s16 = sadd.s32 1, %s12
  $region7: #{ner_forward.1} parent=0 // loop_footer_branch
    %11 = sbr.rel target = $region3
  $region8: #{ner_forward.1} parent=0 // loop_exit
    _

</llo_original>
